<compile_context>
chip_gen: v5e
topology: v5e:2x2
jax: 0.10.0
libtpu: 0.0.40
codegen_flags: <defaults>
</compile_context>

<pallas_src>
import jax
import jax.numpy as jnp
import numpy as np
from jax.experimental import pallas as pl
from jax.experimental.pallas import tpu as pltpu

D_MODEL = 32
N_HEAD = 4
STRIDE = 8
SEQ = STRIDE + 1                # time_mask is (stride+1, stride+1) => N == stride+1
BATCH = 2
HEAD_DIM = D_MODEL // N_HEAD
EPS = 1e-5


def _layer_norm(z, g, b):
    # Fused single-pass statistics: sum and sum-of-squares computed together
    # (independent reductions, no (z - mu) pre-pass), var = E[z^2] - E[z]^2.
    inv_c = 1.0 / z.shape[-1]
    s1 = jnp.sum(z, axis=-1, keepdims=True)
    s2 = jnp.sum(z * z, axis=-1, keepdims=True)
    mu = s1 * inv_c
    var = s2 * inv_c - mu * mu
    return (z - mu) * jax.lax.rsqrt(var + EPS) * g + b


def _block_kernel(x_ref, mask_ref, g1_ref, b1_ref, wqkv_ref, wprojh_ref,
                  bproj_ref, g2_ref, b2_ref, wfc_ref, bfc_ref, wcp_ref,
                  bcp_ref, out_ref, attn_ref):
    M, C = x_ref.shape            # (B*N, C), batch-major rows (row m = b*N + n)
    B, N = BATCH, SEQ
    H, D = N_HEAD, HEAD_DIM
    scale = D ** -0.5

    # ---- hoist every parameter load out of the static loops ----
    mask_bias = mask_ref[...]                      # (N, N) additive 0 / -inf
    g1, b1 = g1_ref[...], b1_ref[...]
    g2, b2 = g2_ref[...], b2_ref[...]
    bproj = bproj_ref[...]
    wfc, bfc = wfc_ref[...], bfc_ref[...]
    wcp, bcp = wcp_ref[...], bcp_ref[...]
    wproj_h = [wprojh_ref[h] for h in range(H)]    # (D, C) each: leading-dim index

    xb = x_ref[...]                                # (M, C)

    # ---- LayerNorm 1 over all B*N rows at once ----
    xln = _layer_norm(xb, g1, b1)                  # (M, C)

    # ---- single wide QKV matmul (qkv_bias=False), native (part, head, d) cols ----
    qkv = jnp.dot(xln, wqkv_ref[...], preferred_element_type=jnp.float32)  # (M, 3C)

    attn_blocks = []
    res_blocks = []
    for b in range(B):                             # static loop, B == 2
        r0 = b * N
        qkv_b = qkv[r0:r0 + N, :]                  # (N, 3C) per-batch block
        x_b = xb[r0:r0 + N, :]                     # (N, C) residual input

        y_b = None                                 # fused head-merge + out-proj accum
        p_heads = []
        for h in range(H):                         # static loop, H == 4
            q_h = qkv_b[:, h * D:(h + 1) * D]                      # (N, D)
            k_h = qkv_b[:, C + h * D:C + (h + 1) * D]              # (N, D)
            v_h = qkv_b[:, 2 * C + h * D:2 * C + (h + 1) * D]      # (N, D)

            # scores: q @ k^T without materializing a transpose
            s = jax.lax.dot_general(q_h, k_h, (((1,), (1,)), ((), ())),
                                    preferred_element_type=jnp.float32) * scale
            s = s + mask_bias                      # causal (diagonal always visible)

            # softmax (exact reciprocal: attn is a checked output at 2e-5)
            m_ = jnp.max(s, axis=-1, keepdims=True)
            p = jnp.exp(s - m_)
            p = p * pl.reciprocal(jnp.sum(p, axis=-1, keepdims=True), approx=False)
            p_heads.append(p)

            o_h = jnp.dot(p, v_h, preferred_element_type=jnp.float32)     # (N, D)
            contrib = jnp.dot(o_h, wproj_h[h], preferred_element_type=jnp.float32)
            y_b = contrib if y_b is None else y_b + contrib               # (N, C)

        attn_blocks.append(jnp.stack(p_heads, axis=0))                    # (H, N, N)

        # ---- residual 1, LayerNorm 2, QuickGELU MLP, residual 2 (per batch) ----
        x2_b = x_b + y_b + bproj
        x2n = _layer_norm(x2_b, g2, b2)
        h1 = jnp.dot(x2n, wfc, preferred_element_type=jnp.float32) + bfc
        h1 = h1 * jax.nn.sigmoid(1.702 * h1)                              # QuickGELU
        h2 = jnp.dot(h1, wcp, preferred_element_type=jnp.float32) + bcp
        res_blocks.append(x2_b + h2)                                      # (N, C)

    # ---- single full-slab stores for both outputs ----
    attn_ref[...] = jnp.stack(attn_blocks, axis=0)                        # (B, H, N, N)
    out_ref[...] = jnp.stack(res_blocks, axis=0)                          # (B, N, C)


def make_mask_bias(seq):
    """Additive causal mask: 0 where visible (lower triangle incl. diagonal),
    -inf elsewhere.  Host precomputed, mirroring the module's `time_mask`."""
    tri = np.tril(np.ones((seq, seq), np.float32))
    bias = np.where(tri > 0.0, 0.0, -np.inf).astype(np.float32)
    return jnp.asarray(bias)


def prepare_params(params):
    """Host-side, one-time re-layout of the PyTorch-style weights."""
    g1, b1, wqkv, wproj, bproj, g2, b2, wfc, bfc, wcp, bcp = params
    # wqkv stays in its native (C, 3C) = (part, head, d) column order -> one wide matmul.
    # wproj is re-laid head-major (H, D, C) so the fused head-merge+projection
    # indexes a leading dim (free) instead of slicing weight rows in-kernel.
    wprojh = wproj.reshape(N_HEAD, HEAD_DIM, D_MODEL)
    return (g1, b1, wqkv, wprojh, bproj, g2, b2, wfc, bfc, wcp, bcp)


def residual_attention_block(x_nbc, kernel_params, mask_bias):
    """x_nbc: (N, B, C) float32.  Returns (out (N, B, C), attn (B, H, N, N))."""
    N, B, C = x_nbc.shape
    # Wrapper-side layout plumbing (cheap XLA ops on ~2 KiB): fold the batch
    # into the matmul M axis with batch-major rows.
    x2d = jnp.transpose(x_nbc, (1, 0, 2)).reshape(B * N, C)

    vmem = pl.BlockSpec(memory_space=pltpu.MemorySpace.VMEM)
    out_shape = (
        jax.ShapeDtypeStruct((B, N, C), jnp.float32),
        jax.ShapeDtypeStruct((B, N_HEAD, N, N), jnp.float32),
    )
    # Single invocation, no grid (optimal on single-TensorCore v5e/v6e; a
    # grid=(B,) "parallel" variant would be the v7x two-core option).
    out_bnc, attn = pl.pallas_call(
        _block_kernel,
        out_shape=out_shape,
        in_specs=[vmem] * (2 + len(kernel_params)),
        out_specs=(vmem, vmem),
    )(x2d, mask_bias, *kernel_params)
    return jnp.transpose(out_bnc, (1, 0, 2)), attn


def reference(x_nbc, params):
    """Pure-JAX reference mirroring the PyTorch forward, for verification."""
    g1, b1, wqkv, wproj, bproj, g2, b2, wfc, bfc, wcp, bcp = params
    x = jnp.transpose(x_nbc, (1, 0, 2))            # (B, N, C)
    B, N, C = x.shape

    def ln(z, g, b):
        mu = z.mean(-1, keepdims=True)
        var = ((z - mu) ** 2).mean(-1, keepdims=True)
        return (z - mu) / jnp.sqrt(var + EPS) * g[0] + b[0]

    xln = ln(x, g1, b1)
    qkv = (xln @ wqkv).reshape(B, N, 3, N_HEAD, HEAD_DIM).transpose(2, 0, 3, 1, 4)
    q, k, v = qkv[0], qkv[1], qkv[2]
    attn = jnp.einsum('bhnd,bhmd->bhnm', q, k) * (HEAD_DIM ** -0.5)
    mask = jnp.tril(jnp.ones((N, N), bool))
    attn = jnp.where(mask, attn, -jnp.inf)
    attn = jax.nn.softmax(attn, axis=-1)
    y = jnp.einsum('bhnm,bhmd->bhnd', attn, v).transpose(0, 2, 1, 3).reshape(B, N, C)
    y = y @ wproj + bproj[0]
    x2 = x + y
    hh = ln(x2, g2, b2) @ wfc + bfc[0]
    hh = hh * jax.nn.sigmoid(1.702 * hh)
    out = x2 + hh @ wcp + bcp[0]
    return jnp.transpose(out, (1, 0, 2)), attn


def init_params(key, C):
    ks = jax.random.split(key, 8)
    s = 0.05
    g1 = jnp.ones((1, C), jnp.float32)
    b1 = jnp.zeros((1, C), jnp.float32)
    wqkv = (jax.random.normal(ks[0], (C, 3 * C)) * s).astype(jnp.float32)
    wproj = (jax.random.normal(ks[1], (C, C)) * s).astype(jnp.float32)
    bproj = (jax.random.normal(ks[2], (1, C)) * s).astype(jnp.float32)
    g2 = jnp.ones((1, C), jnp.float32)
    b2 = jnp.zeros((1, C), jnp.float32)
    wfc = (jax.random.normal(ks[3], (C, 4 * C)) * s).astype(jnp.float32)
    bfc = (jax.random.normal(ks[4], (1, 4 * C)) * s).astype(jnp.float32)
    wcp = (jax.random.normal(ks[5], (4 * C, C)) * s).astype(jnp.float32)
    bcp = (jax.random.normal(ks[6], (1, C)) * s).astype(jnp.float32)
    return (g1, b1, wqkv, wproj, bproj, g2, b2, wfc, bfc, wcp, bcp)


if __name__ == "__main__":
    key = jax.random.PRNGKey(0)
    kx, kp = jax.random.split(key)
    x = jax.random.normal(kx, (SEQ, BATCH, D_MODEL), dtype=jnp.float32)  # (N, B, C)
    params = init_params(kp, D_MODEL)

    kernel_params = prepare_params(params)     # one-time host-side re-layout
    mask_bias = make_mask_bias(SEQ)            # host-precomputed causal time_mask

    block_fn = jax.jit(residual_attention_block)
    out, attn = block_fn(x, kernel_params, mask_bias)
    out = jax.block_until_ready(out)
    attn = jax.block_until_ready(attn)

    ref_out, ref_attn = reference(x, params)
    np.testing.assert_allclose(np.asarray(out), np.asarray(ref_out), rtol=2e-5, atol=2e-5)
    np.testing.assert_allclose(np.asarray(attn), np.asarray(ref_attn), rtol=2e-5, atol=2e-5)

    print("KERNEL_OK")
</pallas_src>

<mosaic_0001>
module attributes {stable_mosaic.version = 11 : i64} {
  func.func @_block_kernel(%arg0: memref<18x32xf32, #tpu.memory_space<vmem>>, %arg1: memref<9x9xf32, #tpu.memory_space<vmem>>, %arg2: memref<1x32xf32, #tpu.memory_space<vmem>>, %arg3: memref<1x32xf32, #tpu.memory_space<vmem>>, %arg4: memref<32x96xf32, #tpu.memory_space<vmem>>, %arg5: memref<4x8x32xf32, #tpu.memory_space<vmem>>, %arg6: memref<1x32xf32, #tpu.memory_space<vmem>>, %arg7: memref<1x32xf32, #tpu.memory_space<vmem>>, %arg8: memref<1x32xf32, #tpu.memory_space<vmem>>, %arg9: memref<32x128xf32, #tpu.memory_space<vmem>>, %arg10: memref<1x128xf32, #tpu.memory_space<vmem>>, %arg11: memref<128x32xf32, #tpu.memory_space<vmem>>, %arg12: memref<1x32xf32, #tpu.memory_space<vmem>>, %arg13: memref<2x9x32xf32, #tpu.memory_space<vmem>>, %arg14: memref<2x4x9x9xf32, #tpu.memory_space<vmem>>) attributes {dimension_semantics = [], scalar_prefetch = 0 : i64, scratch_operands = 0 : i64, tpu.core_type = #tpu.core_type<tc>} {
    %c0 = arith.constant 0 : index
    %c0_0 = arith.constant 0 : index
    %0 = vector.load %arg1[%c0, %c0_0] : memref<9x9xf32, #tpu.memory_space<vmem>>, vector<9x9xf32>
    %c0_1 = arith.constant 0 : index
    %c0_2 = arith.constant 0 : index
    %1 = vector.load %arg2[%c0_1, %c0_2] : memref<1x32xf32, #tpu.memory_space<vmem>>, vector<1x32xf32>
    %c0_3 = arith.constant 0 : index
    %c0_4 = arith.constant 0 : index
    %2 = vector.load %arg3[%c0_3, %c0_4] : memref<1x32xf32, #tpu.memory_space<vmem>>, vector<1x32xf32>
    %c0_5 = arith.constant 0 : index
    %c0_6 = arith.constant 0 : index
    %3 = vector.load %arg7[%c0_5, %c0_6] : memref<1x32xf32, #tpu.memory_space<vmem>>, vector<1x32xf32>
    %c0_7 = arith.constant 0 : index
    %c0_8 = arith.constant 0 : index
    %4 = vector.load %arg8[%c0_7, %c0_8] : memref<1x32xf32, #tpu.memory_space<vmem>>, vector<1x32xf32>
    %c0_9 = arith.constant 0 : index
    %c0_10 = arith.constant 0 : index
    %5 = vector.load %arg6[%c0_9, %c0_10] : memref<1x32xf32, #tpu.memory_space<vmem>>, vector<1x32xf32>
    %c0_11 = arith.constant 0 : index
    %c0_12 = arith.constant 0 : index
    %6 = vector.load %arg9[%c0_11, %c0_12] : memref<32x128xf32, #tpu.memory_space<vmem>>, vector<32x128xf32>
    %c0_13 = arith.constant 0 : index
    %c0_14 = arith.constant 0 : index
    %7 = vector.load %arg10[%c0_13, %c0_14] : memref<1x128xf32, #tpu.memory_space<vmem>>, vector<1x128xf32>
    %c0_15 = arith.constant 0 : index
    %c0_16 = arith.constant 0 : index
    %8 = vector.load %arg11[%c0_15, %c0_16] : memref<128x32xf32, #tpu.memory_space<vmem>>, vector<128x32xf32>
    %c0_17 = arith.constant 0 : index
    %c0_18 = arith.constant 0 : index
    %9 = vector.load %arg12[%c0_17, %c0_18] : memref<1x32xf32, #tpu.memory_space<vmem>>, vector<1x32xf32>
    %c0_19 = arith.constant 0 : index
    %c0_20 = arith.constant 0 : index
    %c0_21 = arith.constant 0 : index
    %10 = vector.load %arg5[%c0_19, %c0_20, %c0_21] : memref<4x8x32xf32, #tpu.memory_space<vmem>>, vector<1x8x32xf32>
    %11 = vector.shape_cast %10 : vector<1x8x32xf32> to vector<8x32xf32>
    %c1 = arith.constant 1 : index
    %c0_22 = arith.constant 0 : index
    %c0_23 = arith.constant 0 : index
    %12 = vector.load %arg5[%c1, %c0_22, %c0_23] : memref<4x8x32xf32, #tpu.memory_space<vmem>>, vector<1x8x32xf32>
    %13 = vector.shape_cast %12 : vector<1x8x32xf32> to vector<8x32xf32>
    %c2 = arith.constant 2 : index
    %c0_24 = arith.constant 0 : index
    %c0_25 = arith.constant 0 : index
    %14 = vector.load %arg5[%c2, %c0_24, %c0_25] : memref<4x8x32xf32, #tpu.memory_space<vmem>>, vector<1x8x32xf32>
    %15 = vector.shape_cast %14 : vector<1x8x32xf32> to vector<8x32xf32>
    %c3 = arith.constant 3 : index
    %c0_26 = arith.constant 0 : index
    %c0_27 = arith.constant 0 : index
    %16 = vector.load %arg5[%c3, %c0_26, %c0_27] : memref<4x8x32xf32, #tpu.memory_space<vmem>>, vector<1x8x32xf32>
    %17 = vector.shape_cast %16 : vector<1x8x32xf32> to vector<8x32xf32>
    %c0_28 = arith.constant 0 : index
    %c0_29 = arith.constant 0 : index
    %18 = vector.load %arg0[%c0_28, %c0_29] : memref<18x32xf32, #tpu.memory_space<vmem>>, vector<18x32xf32>
    %cst = arith.constant dense<0.000000e+00> : vector<18xf32>
    %19 = vector.multi_reduction <add>, %18, %cst [1] : vector<18x32xf32> to vector<18xf32>
    %20 = vector.shape_cast %19 : vector<18xf32> to vector<18x1xf32>
    %21 = arith.mulf %18, %18 : vector<18x32xf32>
    %cst_30 = arith.constant dense<0.000000e+00> : vector<18xf32>
    %22 = vector.multi_reduction <add>, %21, %cst_30 [1] : vector<18x32xf32> to vector<18xf32>
    %23 = vector.shape_cast %22 : vector<18xf32> to vector<18x1xf32>
    %cst_31 = arith.constant 3.125000e-02 : f32
    %24 = vector.broadcast %cst_31 : f32 to vector<18x1xf32>
    %25 = arith.mulf %20, %24 : vector<18x1xf32>
    %cst_32 = arith.constant 3.125000e-02 : f32
    %26 = vector.broadcast %cst_32 : f32 to vector<18x1xf32>
    %27 = arith.mulf %23, %26 : vector<18x1xf32>
    %28 = arith.mulf %25, %25 : vector<18x1xf32>
    %29 = arith.subf %27, %28 : vector<18x1xf32>
    %30 = vector.broadcast %25 : vector<18x1xf32> to vector<18x32xf32>
    %31 = arith.subf %18, %30 : vector<18x32xf32>
    %cst_33 = arith.constant 9.99999974E-6 : f32
    %32 = vector.broadcast %cst_33 : f32 to vector<18x1xf32>
    %33 = arith.addf %29, %32 : vector<18x1xf32>
    %34 = math.rsqrt %33 : vector<18x1xf32>
    %35 = vector.broadcast %34 : vector<18x1xf32> to vector<18x32xf32>
    %36 = arith.mulf %31, %35 : vector<18x32xf32>
    %37 = vector.broadcast %1 : vector<1x32xf32> to vector<18x32xf32>
    %38 = arith.mulf %36, %37 : vector<18x32xf32>
    %39 = vector.broadcast %2 : vector<1x32xf32> to vector<18x32xf32>
    %40 = arith.addf %38, %39 : vector<18x32xf32>
    %c0_34 = arith.constant 0 : index
    %c0_35 = arith.constant 0 : index
    %41 = vector.load %arg4[%c0_34, %c0_35] : memref<32x96xf32, #tpu.memory_space<vmem>>, vector<32x96xf32>
    %cst_36 = arith.constant dense<0.000000e+00> : vector<18x96xf32>
    %42 = tpu.matmul %40, %41, %cst_36 {dimension_numbers = #tpu.dot_dimension_numbers<[1], [0], [0], [1], [0, 0, 1, 1], [], []>} : vector<18x32xf32>, vector<32x96xf32>, vector<18x96xf32> -> vector<18x96xf32>
    %43 = vector.extract_strided_slice %42 {offsets = [0, 0], sizes = [9, 96], strides = [1, 1]} : vector<18x96xf32> to vector<9x96xf32>
    %44 = vector.extract_strided_slice %18 {offsets = [0, 0], sizes = [9, 32], strides = [1, 1]} : vector<18x32xf32> to vector<9x32xf32>
    %45 = vector.extract_strided_slice %43 {offsets = [0, 0], sizes = [9, 8], strides = [1, 1]} : vector<9x96xf32> to vector<9x8xf32>
    %46 = vector.extract_strided_slice %43 {offsets = [0, 32], sizes = [9, 8], strides = [1, 1]} : vector<9x96xf32> to vector<9x8xf32>
    %47 = vector.extract_strided_slice %43 {offsets = [0, 64], sizes = [9, 8], strides = [1, 1]} : vector<9x96xf32> to vector<9x8xf32>
    %cst_37 = arith.constant dense<0.000000e+00> : vector<9x9xf32>
    %48 = tpu.matmul %45, %46, %cst_37 {dimension_numbers = #tpu.dot_dimension_numbers<[1], [1], [0], [0], [0, 0, 1, 0], [], []>} : vector<9x8xf32>, vector<9x8xf32>, vector<9x9xf32> -> vector<9x9xf32>
    %cst_38 = arith.constant 0.353553385 : f32
    %49 = vector.broadcast %cst_38 : f32 to vector<9x9xf32>
    %50 = arith.mulf %48, %49 : vector<9x9xf32>
    %51 = arith.addf %50, %0 : vector<9x9xf32>
    %cst_39 = arith.constant dense<0xFF800000> : vector<9xf32>
    %52 = vector.multi_reduction <maximumf>, %51, %cst_39 [1] : vector<9x9xf32> to vector<9xf32>
    %53 = vector.shape_cast %52 : vector<9xf32> to vector<9x1xf32>
    %54 = vector.broadcast %53 : vector<9x1xf32> to vector<9x9xf32>
    %55 = arith.subf %51, %54 : vector<9x9xf32>
    %56 = math.exp %55 : vector<9x9xf32>
    %cst_40 = arith.constant dense<0.000000e+00> : vector<9xf32>
    %57 = vector.multi_reduction <add>, %56, %cst_40 [1] : vector<9x9xf32> to vector<9xf32>
    %58 = vector.shape_cast %57 : vector<9xf32> to vector<9x1xf32>
    %59 = tpu.reciprocal %58 : vector<9x1xf32> -> vector<9x1xf32>
    %60 = vector.broadcast %59 : vector<9x1xf32> to vector<9x9xf32>
    %61 = arith.mulf %56, %60 : vector<9x9xf32>
    %cst_41 = arith.constant dense<0.000000e+00> : vector<9x8xf32>
    %62 = tpu.matmul %61, %47, %cst_41 {dimension_numbers = #tpu.dot_dimension_numbers<[1], [0], [0], [1], [0, 0, 1, 1], [], []>} : vector<9x9xf32>, vector<9x8xf32>, vector<9x8xf32> -> vector<9x8xf32>
    %cst_42 = arith.constant dense<0.000000e+00> : vector<9x32xf32>
    %63 = tpu.matmul %62, %11, %cst_42 {dimension_numbers = #tpu.dot_dimension_numbers<[1], [0], [0], [1], [0, 0, 1, 1], [], []>} : vector<9x8xf32>, vector<8x32xf32>, vector<9x32xf32> -> vector<9x32xf32>
    %64 = vector.extract_strided_slice %43 {offsets = [0, 8], sizes = [9, 8], strides = [1, 1]} : vector<9x96xf32> to vector<9x8xf32>
    %65 = vector.extract_strided_slice %43 {offsets = [0, 40], sizes = [9, 8], strides = [1, 1]} : vector<9x96xf32> to vector<9x8xf32>
    %66 = vector.extract_strided_slice %43 {offsets = [0, 72], sizes = [9, 8], strides = [1, 1]} : vector<9x96xf32> to vector<9x8xf32>
    %cst_43 = arith.constant dense<0.000000e+00> : vector<9x9xf32>
    %67 = tpu.matmul %64, %65, %cst_43 {dimension_numbers = #tpu.dot_dimension_numbers<[1], [1], [0], [0], [0, 0, 1, 0], [], []>} : vector<9x8xf32>, vector<9x8xf32>, vector<9x9xf32> -> vector<9x9xf32>
    %cst_44 = arith.constant 0.353553385 : f32
    %68 = vector.broadcast %cst_44 : f32 to vector<9x9xf32>
    %69 = arith.mulf %67, %68 : vector<9x9xf32>
    %70 = arith.addf %69, %0 : vector<9x9xf32>
    %cst_45 = arith.constant dense<0xFF800000> : vector<9xf32>
    %71 = vector.multi_reduction <maximumf>, %70, %cst_45 [1] : vector<9x9xf32> to vector<9xf32>
    %72 = vector.shape_cast %71 : vector<9xf32> to vector<9x1xf32>
    %73 = vector.broadcast %72 : vector<9x1xf32> to vector<9x9xf32>
    %74 = arith.subf %70, %73 : vector<9x9xf32>
    %75 = math.exp %74 : vector<9x9xf32>
    %cst_46 = arith.constant dense<0.000000e+00> : vector<9xf32>
    %76 = vector.multi_reduction <add>, %75, %cst_46 [1] : vector<9x9xf32> to vector<9xf32>
    %77 = vector.shape_cast %76 : vector<9xf32> to vector<9x1xf32>
    %78 = tpu.reciprocal %77 : vector<9x1xf32> -> vector<9x1xf32>
    %79 = vector.broadcast %78 : vector<9x1xf32> to vector<9x9xf32>
    %80 = arith.mulf %75, %79 : vector<9x9xf32>
    %cst_47 = arith.constant dense<0.000000e+00> : vector<9x8xf32>
    %81 = tpu.matmul %80, %66, %cst_47 {dimension_numbers = #tpu.dot_dimension_numbers<[1], [0], [0], [1], [0, 0, 1, 1], [], []>} : vector<9x9xf32>, vector<9x8xf32>, vector<9x8xf32> -> vector<9x8xf32>
    %cst_48 = arith.constant dense<0.000000e+00> : vector<9x32xf32>
    %82 = tpu.matmul %81, %13, %cst_48 {dimension_numbers = #tpu.dot_dimension_numbers<[1], [0], [0], [1], [0, 0, 1, 1], [], []>} : vector<9x8xf32>, vector<8x32xf32>, vector<9x32xf32> -> vector<9x32xf32>
    %83 = arith.addf %63, %82 : vector<9x32xf32>
    %84 = vector.extract_strided_slice %43 {offsets = [0, 16], sizes = [9, 8], strides = [1, 1]} : vector<9x96xf32> to vector<9x8xf32>
    %85 = vector.extract_strided_slice %43 {offsets = [0, 48], sizes = [9, 8], strides = [1, 1]} : vector<9x96xf32> to vector<9x8xf32>
    %86 = vector.extract_strided_slice %43 {offsets = [0, 80], sizes = [9, 8], strides = [1, 1]} : vector<9x96xf32> to vector<9x8xf32>
    %cst_49 = arith.constant dense<0.000000e+00> : vector<9x9xf32>
    %87 = tpu.matmul %84, %85, %cst_49 {dimension_numbers = #tpu.dot_dimension_numbers<[1], [1], [0], [0], [0, 0, 1, 0], [], []>} : vector<9x8xf32>, vector<9x8xf32>, vector<9x9xf32> -> vector<9x9xf32>
    %cst_50 = arith.constant 0.353553385 : f32
    %88 = vector.broadcast %cst_50 : f32 to vector<9x9xf32>
    %89 = arith.mulf %87, %88 : vector<9x9xf32>
    %90 = arith.addf %89, %0 : vector<9x9xf32>
    %cst_51 = arith.constant dense<0xFF800000> : vector<9xf32>
    %91 = vector.multi_reduction <maximumf>, %90, %cst_51 [1] : vector<9x9xf32> to vector<9xf32>
    %92 = vector.shape_cast %91 : vector<9xf32> to vector<9x1xf32>
    %93 = vector.broadcast %92 : vector<9x1xf32> to vector<9x9xf32>
    %94 = arith.subf %90, %93 : vector<9x9xf32>
    %95 = math.exp %94 : vector<9x9xf32>
    %cst_52 = arith.constant dense<0.000000e+00> : vector<9xf32>
    %96 = vector.multi_reduction <add>, %95, %cst_52 [1] : vector<9x9xf32> to vector<9xf32>
    %97 = vector.shape_cast %96 : vector<9xf32> to vector<9x1xf32>
    %98 = tpu.reciprocal %97 : vector<9x1xf32> -> vector<9x1xf32>
    %99 = vector.broadcast %98 : vector<9x1xf32> to vector<9x9xf32>
    %100 = arith.mulf %95, %99 : vector<9x9xf32>
    %cst_53 = arith.constant dense<0.000000e+00> : vector<9x8xf32>
    %101 = tpu.matmul %100, %86, %cst_53 {dimension_numbers = #tpu.dot_dimension_numbers<[1], [0], [0], [1], [0, 0, 1, 1], [], []>} : vector<9x9xf32>, vector<9x8xf32>, vector<9x8xf32> -> vector<9x8xf32>
    %cst_54 = arith.constant dense<0.000000e+00> : vector<9x32xf32>
    %102 = tpu.matmul %101, %15, %cst_54 {dimension_numbers = #tpu.dot_dimension_numbers<[1], [0], [0], [1], [0, 0, 1, 1], [], []>} : vector<9x8xf32>, vector<8x32xf32>, vector<9x32xf32> -> vector<9x32xf32>
    %103 = arith.addf %83, %102 : vector<9x32xf32>
    %104 = vector.extract_strided_slice %43 {offsets = [0, 24], sizes = [9, 8], strides = [1, 1]} : vector<9x96xf32> to vector<9x8xf32>
    %105 = vector.extract_strided_slice %43 {offsets = [0, 56], sizes = [9, 8], strides = [1, 1]} : vector<9x96xf32> to vector<9x8xf32>
    %106 = vector.extract_strided_slice %43 {offsets = [0, 88], sizes = [9, 8], strides = [1, 1]} : vector<9x96xf32> to vector<9x8xf32>
    %cst_55 = arith.constant dense<0.000000e+00> : vector<9x9xf32>
    %107 = tpu.matmul %104, %105, %cst_55 {dimension_numbers = #tpu.dot_dimension_numbers<[1], [1], [0], [0], [0, 0, 1, 0], [], []>} : vector<9x8xf32>, vector<9x8xf32>, vector<9x9xf32> -> vector<9x9xf32>
    %cst_56 = arith.constant 0.353553385 : f32
    %108 = vector.broadcast %cst_56 : f32 to vector<9x9xf32>
    %109 = arith.mulf %107, %108 : vector<9x9xf32>
    %110 = arith.addf %109, %0 : vector<9x9xf32>
    %cst_57 = arith.constant dense<0xFF800000> : vector<9xf32>
    %111 = vector.multi_reduction <maximumf>, %110, %cst_57 [1] : vector<9x9xf32> to vector<9xf32>
    %112 = vector.shape_cast %111 : vector<9xf32> to vector<9x1xf32>
    %113 = vector.broadcast %112 : vector<9x1xf32> to vector<9x9xf32>
    %114 = arith.subf %110, %113 : vector<9x9xf32>
    %115 = math.exp %114 : vector<9x9xf32>
    %cst_58 = arith.constant dense<0.000000e+00> : vector<9xf32>
    %116 = vector.multi_reduction <add>, %115, %cst_58 [1] : vector<9x9xf32> to vector<9xf32>
    %117 = vector.shape_cast %116 : vector<9xf32> to vector<9x1xf32>
    %118 = tpu.reciprocal %117 : vector<9x1xf32> -> vector<9x1xf32>
    %119 = vector.broadcast %118 : vector<9x1xf32> to vector<9x9xf32>
    %120 = arith.mulf %115, %119 : vector<9x9xf32>
    %cst_59 = arith.constant dense<0.000000e+00> : vector<9x8xf32>
    %121 = tpu.matmul %120, %106, %cst_59 {dimension_numbers = #tpu.dot_dimension_numbers<[1], [0], [0], [1], [0, 0, 1, 1], [], []>} : vector<9x9xf32>, vector<9x8xf32>, vector<9x8xf32> -> vector<9x8xf32>
    %cst_60 = arith.constant dense<0.000000e+00> : vector<9x32xf32>
    %122 = tpu.matmul %121, %17, %cst_60 {dimension_numbers = #tpu.dot_dimension_numbers<[1], [0], [0], [1], [0, 0, 1, 1], [], []>} : vector<9x8xf32>, vector<8x32xf32>, vector<9x32xf32> -> vector<9x32xf32>
    %123 = arith.addf %103, %122 : vector<9x32xf32>
    %124 = vector.shape_cast %61 : vector<9x9xf32> to vector<1x9x9xf32>
    %125 = vector.shape_cast %80 : vector<9x9xf32> to vector<1x9x9xf32>
    %126 = vector.shape_cast %100 : vector<9x9xf32> to vector<1x9x9xf32>
    %127 = vector.shape_cast %120 : vector<9x9xf32> to vector<1x9x9xf32>
    %128 = tpu.concatenate %124, %125, %126, %127 in 0 : vector<1x9x9xf32>, vector<1x9x9xf32>, vector<1x9x9xf32>, vector<1x9x9xf32> -> vector<4x9x9xf32>
    %129 = arith.addf %44, %123 : vector<9x32xf32>
    %130 = vector.broadcast %5 : vector<1x32xf32> to vector<9x32xf32>
    %131 = arith.addf %129, %130 : vector<9x32xf32>
    %cst_61 = arith.constant dense<0.000000e+00> : vector<9xf32>
    %132 = vector.multi_reduction <add>, %131, %cst_61 [1] : vector<9x32xf32> to vector<9xf32>
    %133 = vector.shape_cast %132 : vector<9xf32> to vector<9x1xf32>
    %134 = arith.mulf %131, %131 : vector<9x32xf32>
    %cst_62 = arith.constant dense<0.000000e+00> : vector<9xf32>
    %135 = vector.multi_reduction <add>, %134, %cst_62 [1] : vector<9x32xf32> to vector<9xf32>
    %136 = vector.shape_cast %135 : vector<9xf32> to vector<9x1xf32>
    %cst_63 = arith.constant 3.125000e-02 : f32
    %137 = vector.broadcast %cst_63 : f32 to vector<9x1xf32>
    %138 = arith.mulf %133, %137 : vector<9x1xf32>
    %cst_64 = arith.constant 3.125000e-02 : f32
    %139 = vector.broadcast %cst_64 : f32 to vector<9x1xf32>
    %140 = arith.mulf %136, %139 : vector<9x1xf32>
    %141 = arith.mulf %138, %138 : vector<9x1xf32>
    %142 = arith.subf %140, %141 : vector<9x1xf32>
    %143 = vector.broadcast %138 : vector<9x1xf32> to vector<9x32xf32>
    %144 = arith.subf %131, %143 : vector<9x32xf32>
    %cst_65 = arith.constant 9.99999974E-6 : f32
    %145 = vector.broadcast %cst_65 : f32 to vector<9x1xf32>
    %146 = arith.addf %142, %145 : vector<9x1xf32>
    %147 = math.rsqrt %146 : vector<9x1xf32>
    %148 = vector.broadcast %147 : vector<9x1xf32> to vector<9x32xf32>
    %149 = arith.mulf %144, %148 : vector<9x32xf32>
    %150 = vector.broadcast %3 : vector<1x32xf32> to vector<9x32xf32>
    %151 = arith.mulf %149, %150 : vector<9x32xf32>
    %152 = vector.broadcast %4 : vector<1x32xf32> to vector<9x32xf32>
    %153 = arith.addf %151, %152 : vector<9x32xf32>
    %cst_66 = arith.constant dense<0.000000e+00> : vector<9x128xf32>
    %154 = tpu.matmul %153, %6, %cst_66 {dimension_numbers = #tpu.dot_dimension_numbers<[1], [0], [0], [1], [0, 0, 1, 1], [], []>} : vector<9x32xf32>, vector<32x128xf32>, vector<9x128xf32> -> vector<9x128xf32>
    %155 = vector.broadcast %7 : vector<1x128xf32> to vector<9x128xf32>
    %156 = arith.addf %154, %155 : vector<9x128xf32>
    %cst_67 = arith.constant 1.702000e+00 : f32
    %157 = vector.broadcast %cst_67 : f32 to vector<9x128xf32>
    %158 = arith.mulf %157, %156 : vector<9x128xf32>
    %159 = arith.negf %158 : vector<9x128xf32>
    %160 = math.exp %159 : vector<9x128xf32>
    %cst_68 = arith.constant 1.000000e+00 : f32
    %161 = vector.broadcast %cst_68 : f32 to vector<9x128xf32>
    %162 = arith.addf %161, %160 : vector<9x128xf32>
    %163 = arith.divf %161, %162 : vector<9x128xf32>
    %164 = arith.mulf %156, %163 : vector<9x128xf32>
    %cst_69 = arith.constant dense<0.000000e+00> : vector<9x32xf32>
    %165 = tpu.matmul %164, %8, %cst_69 {dimension_numbers = #tpu.dot_dimension_numbers<[1], [0], [0], [1], [0, 0, 1, 1], [], []>} : vector<9x128xf32>, vector<128x32xf32>, vector<9x32xf32> -> vector<9x32xf32>
    %166 = vector.broadcast %9 : vector<1x32xf32> to vector<9x32xf32>
    %167 = arith.addf %165, %166 : vector<9x32xf32>
    %168 = arith.addf %131, %167 : vector<9x32xf32>
    %169 = vector.extract_strided_slice %42 {offsets = [9, 0], sizes = [9, 96], strides = [1, 1]} : vector<18x96xf32> to vector<9x96xf32>
    %170 = vector.extract_strided_slice %18 {offsets = [9, 0], sizes = [9, 32], strides = [1, 1]} : vector<18x32xf32> to vector<9x32xf32>
    %171 = vector.extract_strided_slice %169 {offsets = [0, 0], sizes = [9, 8], strides = [1, 1]} : vector<9x96xf32> to vector<9x8xf32>
    %172 = vector.extract_strided_slice %169 {offsets = [0, 32], sizes = [9, 8], strides = [1, 1]} : vector<9x96xf32> to vector<9x8xf32>
    %173 = vector.extract_strided_slice %169 {offsets = [0, 64], sizes = [9, 8], strides = [1, 1]} : vector<9x96xf32> to vector<9x8xf32>
    %cst_70 = arith.constant dense<0.000000e+00> : vector<9x9xf32>
    %174 = tpu.matmul %171, %172, %cst_70 {dimension_numbers = #tpu.dot_dimension_numbers<[1], [1], [0], [0], [0, 0, 1, 0], [], []>} : vector<9x8xf32>, vector<9x8xf32>, vector<9x9xf32> -> vector<9x9xf32>
    %cst_71 = arith.constant 0.353553385 : f32
    %175 = vector.broadcast %cst_71 : f32 to vector<9x9xf32>
    %176 = arith.mulf %174, %175 : vector<9x9xf32>
    %177 = arith.addf %176, %0 : vector<9x9xf32>
    %cst_72 = arith.constant dense<0xFF800000> : vector<9xf32>
    %178 = vector.multi_reduction <maximumf>, %177, %cst_72 [1] : vector<9x9xf32> to vector<9xf32>
    %179 = vector.shape_cast %178 : vector<9xf32> to vector<9x1xf32>
    %180 = vector.broadcast %179 : vector<9x1xf32> to vector<9x9xf32>
    %181 = arith.subf %177, %180 : vector<9x9xf32>
    %182 = math.exp %181 : vector<9x9xf32>
    %cst_73 = arith.constant dense<0.000000e+00> : vector<9xf32>
    %183 = vector.multi_reduction <add>, %182, %cst_73 [1] : vector<9x9xf32> to vector<9xf32>
    %184 = vector.shape_cast %183 : vector<9xf32> to vector<9x1xf32>
    %185 = tpu.reciprocal %184 : vector<9x1xf32> -> vector<9x1xf32>
    %186 = vector.broadcast %185 : vector<9x1xf32> to vector<9x9xf32>
    %187 = arith.mulf %182, %186 : vector<9x9xf32>
    %cst_74 = arith.constant dense<0.000000e+00> : vector<9x8xf32>
    %188 = tpu.matmul %187, %173, %cst_74 {dimension_numbers = #tpu.dot_dimension_numbers<[1], [0], [0], [1], [0, 0, 1, 1], [], []>} : vector<9x9xf32>, vector<9x8xf32>, vector<9x8xf32> -> vector<9x8xf32>
    %cst_75 = arith.constant dense<0.000000e+00> : vector<9x32xf32>
    %189 = tpu.matmul %188, %11, %cst_75 {dimension_numbers = #tpu.dot_dimension_numbers<[1], [0], [0], [1], [0, 0, 1, 1], [], []>} : vector<9x8xf32>, vector<8x32xf32>, vector<9x32xf32> -> vector<9x32xf32>
    %190 = vector.extract_strided_slice %169 {offsets = [0, 8], sizes = [9, 8], strides = [1, 1]} : vector<9x96xf32> to vector<9x8xf32>
    %191 = vector.extract_strided_slice %169 {offsets = [0, 40], sizes = [9, 8], strides = [1, 1]} : vector<9x96xf32> to vector<9x8xf32>
    %192 = vector.extract_strided_slice %169 {offsets = [0, 72], sizes = [9, 8], strides = [1, 1]} : vector<9x96xf32> to vector<9x8xf32>
    %cst_76 = arith.constant dense<0.000000e+00> : vector<9x9xf32>
    %193 = tpu.matmul %190, %191, %cst_76 {dimension_numbers = #tpu.dot_dimension_numbers<[1], [1], [0], [0], [0, 0, 1, 0], [], []>} : vector<9x8xf32>, vector<9x8xf32>, vector<9x9xf32> -> vector<9x9xf32>
    %cst_77 = arith.constant 0.353553385 : f32
    %194 = vector.broadcast %cst_77 : f32 to vector<9x9xf32>
    %195 = arith.mulf %193, %194 : vector<9x9xf32>
    %196 = arith.addf %195, %0 : vector<9x9xf32>
    %cst_78 = arith.constant dense<0xFF800000> : vector<9xf32>
    %197 = vector.multi_reduction <maximumf>, %196, %cst_78 [1] : vector<9x9xf32> to vector<9xf32>
    %198 = vector.shape_cast %197 : vector<9xf32> to vector<9x1xf32>
    %199 = vector.broadcast %198 : vector<9x1xf32> to vector<9x9xf32>
    %200 = arith.subf %196, %199 : vector<9x9xf32>
    %201 = math.exp %200 : vector<9x9xf32>
    %cst_79 = arith.constant dense<0.000000e+00> : vector<9xf32>
    %202 = vector.multi_reduction <add>, %201, %cst_79 [1] : vector<9x9xf32> to vector<9xf32>
    %203 = vector.shape_cast %202 : vector<9xf32> to vector<9x1xf32>
    %204 = tpu.reciprocal %203 : vector<9x1xf32> -> vector<9x1xf32>
    %205 = vector.broadcast %204 : vector<9x1xf32> to vector<9x9xf32>
    %206 = arith.mulf %201, %205 : vector<9x9xf32>
    %cst_80 = arith.constant dense<0.000000e+00> : vector<9x8xf32>
    %207 = tpu.matmul %206, %192, %cst_80 {dimension_numbers = #tpu.dot_dimension_numbers<[1], [0], [0], [1], [0, 0, 1, 1], [], []>} : vector<9x9xf32>, vector<9x8xf32>, vector<9x8xf32> -> vector<9x8xf32>
    %cst_81 = arith.constant dense<0.000000e+00> : vector<9x32xf32>
    %208 = tpu.matmul %207, %13, %cst_81 {dimension_numbers = #tpu.dot_dimension_numbers<[1], [0], [0], [1], [0, 0, 1, 1], [], []>} : vector<9x8xf32>, vector<8x32xf32>, vector<9x32xf32> -> vector<9x32xf32>
    %209 = arith.addf %189, %208 : vector<9x32xf32>
    %210 = vector.extract_strided_slice %169 {offsets = [0, 16], sizes = [9, 8], strides = [1, 1]} : vector<9x96xf32> to vector<9x8xf32>
    %211 = vector.extract_strided_slice %169 {offsets = [0, 48], sizes = [9, 8], strides = [1, 1]} : vector<9x96xf32> to vector<9x8xf32>
    %212 = vector.extract_strided_slice %169 {offsets = [0, 80], sizes = [9, 8], strides = [1, 1]} : vector<9x96xf32> to vector<9x8xf32>
    %cst_82 = arith.constant dense<0.000000e+00> : vector<9x9xf32>
    %213 = tpu.matmul %210, %211, %cst_82 {dimension_numbers = #tpu.dot_dimension_numbers<[1], [1], [0], [0], [0, 0, 1, 0], [], []>} : vector<9x8xf32>, vector<9x8xf32>, vector<9x9xf32> -> vector<9x9xf32>
    %cst_83 = arith.constant 0.353553385 : f32
    %214 = vector.broadcast %cst_83 : f32 to vector<9x9xf32>
    %215 = arith.mulf %213, %214 : vector<9x9xf32>
    %216 = arith.addf %215, %0 : vector<9x9xf32>
    %cst_84 = arith.constant dense<0xFF800000> : vector<9xf32>
    %217 = vector.multi_reduction <maximumf>, %216, %cst_84 [1] : vector<9x9xf32> to vector<9xf32>
    %218 = vector.shape_cast %217 : vector<9xf32> to vector<9x1xf32>
    %219 = vector.broadcast %218 : vector<9x1xf32> to vector<9x9xf32>
    %220 = arith.subf %216, %219 : vector<9x9xf32>
    %221 = math.exp %220 : vector<9x9xf32>
    %cst_85 = arith.constant dense<0.000000e+00> : vector<9xf32>
    %222 = vector.multi_reduction <add>, %221, %cst_85 [1] : vector<9x9xf32> to vector<9xf32>
    %223 = vector.shape_cast %222 : vector<9xf32> to vector<9x1xf32>
    %224 = tpu.reciprocal %223 : vector<9x1xf32> -> vector<9x1xf32>
    %225 = vector.broadcast %224 : vector<9x1xf32> to vector<9x9xf32>
    %226 = arith.mulf %221, %225 : vector<9x9xf32>
    %cst_86 = arith.constant dense<0.000000e+00> : vector<9x8xf32>
    %227 = tpu.matmul %226, %212, %cst_86 {dimension_numbers = #tpu.dot_dimension_numbers<[1], [0], [0], [1], [0, 0, 1, 1], [], []>} : vector<9x9xf32>, vector<9x8xf32>, vector<9x8xf32> -> vector<9x8xf32>
    %cst_87 = arith.constant dense<0.000000e+00> : vector<9x32xf32>
    %228 = tpu.matmul %227, %15, %cst_87 {dimension_numbers = #tpu.dot_dimension_numbers<[1], [0], [0], [1], [0, 0, 1, 1], [], []>} : vector<9x8xf32>, vector<8x32xf32>, vector<9x32xf32> -> vector<9x32xf32>
    %229 = arith.addf %209, %228 : vector<9x32xf32>
    %230 = vector.extract_strided_slice %169 {offsets = [0, 24], sizes = [9, 8], strides = [1, 1]} : vector<9x96xf32> to vector<9x8xf32>
    %231 = vector.extract_strided_slice %169 {offsets = [0, 56], sizes = [9, 8], strides = [1, 1]} : vector<9x96xf32> to vector<9x8xf32>
    %232 = vector.extract_strided_slice %169 {offsets = [0, 88], sizes = [9, 8], strides = [1, 1]} : vector<9x96xf32> to vector<9x8xf32>
    %cst_88 = arith.constant dense<0.000000e+00> : vector<9x9xf32>
    %233 = tpu.matmul %230, %231, %cst_88 {dimension_numbers = #tpu.dot_dimension_numbers<[1], [1], [0], [0], [0, 0, 1, 0], [], []>} : vector<9x8xf32>, vector<9x8xf32>, vector<9x9xf32> -> vector<9x9xf32>
    %cst_89 = arith.constant 0.353553385 : f32
    %234 = vector.broadcast %cst_89 : f32 to vector<9x9xf32>
    %235 = arith.mulf %233, %234 : vector<9x9xf32>
    %236 = arith.addf %235, %0 : vector<9x9xf32>
    %cst_90 = arith.constant dense<0xFF800000> : vector<9xf32>
    %237 = vector.multi_reduction <maximumf>, %236, %cst_90 [1] : vector<9x9xf32> to vector<9xf32>
    %238 = vector.shape_cast %237 : vector<9xf32> to vector<9x1xf32>
    %239 = vector.broadcast %238 : vector<9x1xf32> to vector<9x9xf32>
    %240 = arith.subf %236, %239 : vector<9x9xf32>
    %241 = math.exp %240 : vector<9x9xf32>
    %cst_91 = arith.constant dense<0.000000e+00> : vector<9xf32>
    %242 = vector.multi_reduction <add>, %241, %cst_91 [1] : vector<9x9xf32> to vector<9xf32>
    %243 = vector.shape_cast %242 : vector<9xf32> to vector<9x1xf32>
    %244 = tpu.reciprocal %243 : vector<9x1xf32> -> vector<9x1xf32>
    %245 = vector.broadcast %244 : vector<9x1xf32> to vector<9x9xf32>
    %246 = arith.mulf %241, %245 : vector<9x9xf32>
    %cst_92 = arith.constant dense<0.000000e+00> : vector<9x8xf32>
    %247 = tpu.matmul %246, %232, %cst_92 {dimension_numbers = #tpu.dot_dimension_numbers<[1], [0], [0], [1], [0, 0, 1, 1], [], []>} : vector<9x9xf32>, vector<9x8xf32>, vector<9x8xf32> -> vector<9x8xf32>
    %cst_93 = arith.constant dense<0.000000e+00> : vector<9x32xf32>
    %248 = tpu.matmul %247, %17, %cst_93 {dimension_numbers = #tpu.dot_dimension_numbers<[1], [0], [0], [1], [0, 0, 1, 1], [], []>} : vector<9x8xf32>, vector<8x32xf32>, vector<9x32xf32> -> vector<9x32xf32>
    %249 = arith.addf %229, %248 : vector<9x32xf32>
    %250 = vector.shape_cast %187 : vector<9x9xf32> to vector<1x9x9xf32>
    %251 = vector.shape_cast %206 : vector<9x9xf32> to vector<1x9x9xf32>
    %252 = vector.shape_cast %226 : vector<9x9xf32> to vector<1x9x9xf32>
    %253 = vector.shape_cast %246 : vector<9x9xf32> to vector<1x9x9xf32>
    %254 = tpu.concatenate %250, %251, %252, %253 in 0 : vector<1x9x9xf32>, vector<1x9x9xf32>, vector<1x9x9xf32>, vector<1x9x9xf32> -> vector<4x9x9xf32>
    %255 = arith.addf %170, %249 : vector<9x32xf32>
    %256 = vector.broadcast %5 : vector<1x32xf32> to vector<9x32xf32>
    %257 = arith.addf %255, %256 : vector<9x32xf32>
    %cst_94 = arith.constant dense<0.000000e+00> : vector<9xf32>
    %258 = vector.multi_reduction <add>, %257, %cst_94 [1] : vector<9x32xf32> to vector<9xf32>
    %259 = vector.shape_cast %258 : vector<9xf32> to vector<9x1xf32>
    %260 = arith.mulf %257, %257 : vector<9x32xf32>
    %cst_95 = arith.constant dense<0.000000e+00> : vector<9xf32>
    %261 = vector.multi_reduction <add>, %260, %cst_95 [1] : vector<9x32xf32> to vector<9xf32>
    %262 = vector.shape_cast %261 : vector<9xf32> to vector<9x1xf32>
    %cst_96 = arith.constant 3.125000e-02 : f32
    %263 = vector.broadcast %cst_96 : f32 to vector<9x1xf32>
    %264 = arith.mulf %259, %263 : vector<9x1xf32>
    %cst_97 = arith.constant 3.125000e-02 : f32
    %265 = vector.broadcast %cst_97 : f32 to vector<9x1xf32>
    %266 = arith.mulf %262, %265 : vector<9x1xf32>
    %267 = arith.mulf %264, %264 : vector<9x1xf32>
    %268 = arith.subf %266, %267 : vector<9x1xf32>
    %269 = vector.broadcast %264 : vector<9x1xf32> to vector<9x32xf32>
    %270 = arith.subf %257, %269 : vector<9x32xf32>
    %cst_98 = arith.constant 9.99999974E-6 : f32
    %271 = vector.broadcast %cst_98 : f32 to vector<9x1xf32>
    %272 = arith.addf %268, %271 : vector<9x1xf32>
    %273 = math.rsqrt %272 : vector<9x1xf32>
    %274 = vector.broadcast %273 : vector<9x1xf32> to vector<9x32xf32>
    %275 = arith.mulf %270, %274 : vector<9x32xf32>
    %276 = vector.broadcast %3 : vector<1x32xf32> to vector<9x32xf32>
    %277 = arith.mulf %275, %276 : vector<9x32xf32>
    %278 = vector.broadcast %4 : vector<1x32xf32> to vector<9x32xf32>
    %279 = arith.addf %277, %278 : vector<9x32xf32>
    %cst_99 = arith.constant dense<0.000000e+00> : vector<9x128xf32>
    %280 = tpu.matmul %279, %6, %cst_99 {dimension_numbers = #tpu.dot_dimension_numbers<[1], [0], [0], [1], [0, 0, 1, 1], [], []>} : vector<9x32xf32>, vector<32x128xf32>, vector<9x128xf32> -> vector<9x128xf32>
    %281 = vector.broadcast %7 : vector<1x128xf32> to vector<9x128xf32>
    %282 = arith.addf %280, %281 : vector<9x128xf32>
    %cst_100 = arith.constant 1.702000e+00 : f32
    %283 = vector.broadcast %cst_100 : f32 to vector<9x128xf32>
    %284 = arith.mulf %283, %282 : vector<9x128xf32>
    %285 = arith.negf %284 : vector<9x128xf32>
    %286 = math.exp %285 : vector<9x128xf32>
    %cst_101 = arith.constant 1.000000e+00 : f32
    %287 = vector.broadcast %cst_101 : f32 to vector<9x128xf32>
    %288 = arith.addf %287, %286 : vector<9x128xf32>
    %289 = arith.divf %287, %288 : vector<9x128xf32>
    %290 = arith.mulf %282, %289 : vector<9x128xf32>
    %cst_102 = arith.constant dense<0.000000e+00> : vector<9x32xf32>
    %291 = tpu.matmul %290, %8, %cst_102 {dimension_numbers = #tpu.dot_dimension_numbers<[1], [0], [0], [1], [0, 0, 1, 1], [], []>} : vector<9x128xf32>, vector<128x32xf32>, vector<9x32xf32> -> vector<9x32xf32>
    %292 = vector.broadcast %9 : vector<1x32xf32> to vector<9x32xf32>
    %293 = arith.addf %291, %292 : vector<9x32xf32>
    %294 = arith.addf %257, %293 : vector<9x32xf32>
    %295 = vector.shape_cast %128 : vector<4x9x9xf32> to vector<1x4x9x9xf32>
    %296 = vector.shape_cast %254 : vector<4x9x9xf32> to vector<1x4x9x9xf32>
    %297 = tpu.concatenate %295, %296 in 0 : vector<1x4x9x9xf32>, vector<1x4x9x9xf32> -> vector<2x4x9x9xf32>
    %c0_103 = arith.constant 0 : index
    %c0_104 = arith.constant 0 : index
    %c0_105 = arith.constant 0 : index
    %c0_106 = arith.constant 0 : index
    %298 = vector.load %arg14[%c0_103, %c0_104, %c0_105, %c0_106] : memref<2x4x9x9xf32, #tpu.memory_space<vmem>>, vector<2x4x9x9xf32>
    tpu.vector_store %arg14[%c0_103, %c0_104, %c0_105, %c0_106], %297 {strides = array<i32>} : memref<2x4x9x9xf32, #tpu.memory_space<vmem>>, vector<2x4x9x9xf32>,
    %299 = vector.shape_cast %168 : vector<9x32xf32> to vector<1x9x32xf32>
    %300 = vector.shape_cast %294 : vector<9x32xf32> to vector<1x9x32xf32>
    %301 = tpu.concatenate %299, %300 in 0 : vector<1x9x32xf32>, vector<1x9x32xf32> -> vector<2x9x32xf32>
    %c0_107 = arith.constant 0 : index
    %c0_108 = arith.constant 0 : index
    %c0_109 = arith.constant 0 : index
    %302 = vector.load %arg13[%c0_107, %c0_108, %c0_109] : memref<2x9x32xf32, #tpu.memory_space<vmem>>, vector<2x9x32xf32>
    tpu.vector_store %arg13[%c0_107, %c0_108, %c0_109], %301 {strides = array<i32>} : memref<2x9x32xf32, #tpu.memory_space<vmem>>, vector<2x9x32xf32>,
    return
  }
}

</mosaic_0001>

<llo_original>
// kernel: residual_attention_block.1
$region0: #{residual_attention_block.1}
  #allocation0 [shape = 'u32[]', space=smem, size = 0x4, offset = 0x4, fixed_abs, tag = 'smem constant byte address 0x4 - core index']
  #allocation1 [shape = 'u32[72,128]{1,0:T(1,128)}', space=vmem, size = 0x9000, scoped, tag = 'internal scratch']
  %s0 = inlined_call_operand.vmem [shape: f32[18,32], index: 0, kind: input, shape index: {}]
  %s1 = inlined_call_operand.vmem [shape: f32[9,9], index: 1, kind: input, shape index: {}]
  %s2 = inlined_call_operand.vmem [shape: f32[1,32], index: 2, kind: input, shape index: {}]
  %s3 = inlined_call_operand.vmem [shape: f32[1,32], index: 3, kind: input, shape index: {}]
  %s4 = inlined_call_operand.vmem [shape: f32[32,96], index: 4, kind: input, shape index: {}]
  %s5 = inlined_call_operand.vmem [shape: f32[4,8,32], index: 5, kind: input, shape index: {}]
  %s6 = inlined_call_operand.vmem [shape: f32[1,32], index: 6, kind: input, shape index: {}]
  %s7 = inlined_call_operand.vmem [shape: f32[1,32], index: 7, kind: input, shape index: {}]
  %s8 = inlined_call_operand.vmem [shape: f32[1,32], index: 8, kind: input, shape index: {}]
  %s9 = inlined_call_operand.vmem [shape: f32[32,128], index: 9, kind: input, shape index: {}]
  %s10 = inlined_call_operand.vmem [shape: f32[1,128], index: 10, kind: input, shape index: {}]
  %s11 = inlined_call_operand.vmem [shape: f32[128,32], index: 11, kind: input, shape index: {}]
  %s12 = inlined_call_operand.vmem [shape: f32[1,32], index: 12, kind: input, shape index: {}]
  %s13 = inlined_call_operand.vmem [shape: f32[2,9,32], index: 13, kind: output, shape index: {0}]
  %s14 = inlined_call_operand.vmem [shape: f32[2,4,9,9], index: 14, kind: output, shape index: {1}]
  %15 = xla_tuple %s13, %s14
  %s16 = sld [smem:[#allocation0]]
  $region70: #{residual_attention_block.1} parent=0
    _
  %s18 = ssub.s32 1, %s16
  %s19 = scalar_select 0, %s18, %s16
  // Predicated region
  $region2: #{residual_attention_block.1} parent=0 // pred_check
    _
  $region3: #{residual_attention_block.1} parent=0 // pred_check_branch
    %21 = sbr.rel (0) target = $region5
  $region4: #{residual_attention_block.1} parent=0 // pred_region
    _
  $region5: #{residual_attention_block.1} parent=0 // pred_fallthru
    _
  // Predicated region
  $region6: #{residual_attention_block.1} parent=0 // pred_check
    _
  $region7: #{residual_attention_block.1} parent=0 // pred_check_branch
    %23 = sbr.rel (0) target = $region9
  $region8: #{residual_attention_block.1} parent=0 // pred_region
    _
  $region9: #{residual_attention_block.1} parent=0 // pred_fallthru
    _
  // Predicated region
  $region10: #{residual_attention_block.1} parent=0 // pred_check
    _
  $region11: #{residual_attention_block.1} parent=0 // pred_check_branch
    %25 = sbr.rel (0) target = $region13
  $region12: #{residual_attention_block.1} parent=0 // pred_region
    _
  $region13: #{residual_attention_block.1} parent=0 // pred_fallthru
    _
  // Predicated region
  $region14: #{residual_attention_block.1} parent=0 // pred_check
    _
  $region15: #{residual_attention_block.1} parent=0 // pred_check_branch
    %27 = sbr.rel (0) target = $region17
  $region16: #{residual_attention_block.1} parent=0 // pred_region
    _
  $region17: #{residual_attention_block.1} parent=0 // pred_fallthru
    _
  // Predicated region
  $region18: #{residual_attention_block.1} parent=0 // pred_check
    _
  $region19: #{residual_attention_block.1} parent=0 // pred_check_branch
    %29 = sbr.rel (0) target = $region21
  $region20: #{residual_attention_block.1} parent=0 // pred_region
    _
  $region21: #{residual_attention_block.1} parent=0 // pred_fallthru
    _
  // Predicated region
  $region22: #{residual_attention_block.1} parent=0 // pred_check
    _
  $region23: #{residual_attention_block.1} parent=0 // pred_check_branch
    %31 = sbr.rel (0) target = $region25
  $region24: #{residual_attention_block.1} parent=0 // pred_region
    _
  $region25: #{residual_attention_block.1} parent=0 // pred_fallthru
    _
  // Predicated region
  $region26: #{residual_attention_block.1} parent=0 // pred_check
    _
  $region27: #{residual_attention_block.1} parent=0 // pred_check_branch
    %33 = sbr.rel (0) target = $region29
  $region28: #{residual_attention_block.1} parent=0 // pred_region
    _
  $region29: #{residual_attention_block.1} parent=0 // pred_fallthru
    _
  // Predicated region
  $region30: #{residual_attention_block.1} parent=0 // pred_check
    _
  $region31: #{residual_attention_block.1} parent=0 // pred_check_branch
    %35 = sbr.rel (0) target = $region33
  $region32: #{residual_attention_block.1} parent=0 // pred_region
    _
  $region33: #{residual_attention_block.1} parent=0 // pred_fallthru
    _
  // Predicated region
  $region34: #{residual_attention_block.1} parent=0 // pred_check
    _
  $region35: #{residual_attention_block.1} parent=0 // pred_check_branch
    %37 = sbr.rel (0) target = $region37
  $region36: #{residual_attention_block.1} parent=0 // pred_region
    _
  $region37: #{residual_attention_block.1} parent=0 // pred_fallthru
    _
  // Predicated region
  $region38: #{residual_attention_block.1} parent=0 // pred_check
    _
  $region39: #{residual_attention_block.1} parent=0 // pred_check_branch
    %39 = sbr.rel (0) target = $region41
  $region40: #{residual_attention_block.1} parent=0 // pred_region
    _
  $region41: #{residual_attention_block.1} parent=0 // pred_fallthru
    _
  // Predicated region
  $region42: #{residual_attention_block.1} parent=0 // pred_check
    _
  $region43: #{residual_attention_block.1} parent=0 // pred_check_branch
    %41 = sbr.rel (0) target = $region45
  $region44: #{residual_attention_block.1} parent=0 // pred_region
    _
  $region45: #{residual_attention_block.1} parent=0 // pred_fallthru
    _
  // Predicated region
  $region46: #{residual_attention_block.1} parent=0 // pred_check
    _
  $region47: #{residual_attention_block.1} parent=0 // pred_check_branch
    %43 = sbr.rel (0) target = $region49
  $region48: #{residual_attention_block.1} parent=0 // pred_region
    _
  $region49: #{residual_attention_block.1} parent=0 // pred_fallthru
    _
  // Predicated region
  $region50: #{residual_attention_block.1} parent=0 // pred_check
    _
  $region51: #{residual_attention_block.1} parent=0 // pred_check_branch
    %45 = sbr.rel (0) target = $region53
  $region52: #{residual_attention_block.1} parent=0 // pred_region
    _
  $region53: #{residual_attention_block.1} parent=0 // pred_fallthru
    _
  %v46 = vld [vmem:[%s1] sm:$0xff]
  %v47 = vld [vmem:[%s1 + $0x8] sm:$0x1]
  %v48 = vld [vmem:[%s2] sm:$0x1]
  %v49 = vld [vmem:[%s3] sm:$0x1]
  %v50 = vld [vmem:[%s7] sm:$0x1]
  %v51 = vld [vmem:[%s8] sm:$0x1]
  %v52 = vld [vmem:[%s6] sm:$0x1]
  %v53 = vld [vmem:[%s9] sm:$0xff]
  %v54 = vld [vmem:[%s9 + $0x8] sm:$0xff]
  %v55 = vld [vmem:[%s9 + $0x10] sm:$0xff]
  %v56 = vld [vmem:[%s9 + $0x18] sm:$0xff]
  %v57 = vld [vmem:[%s10] sm:$0x1]
  %v58 = vld [vmem:[%s11] sm:$0xff]
  %v59 = vld [vmem:[%s11 + $0x8] sm:$0xff]
  %v60 = vld [vmem:[%s11 + $0x10] sm:$0xff]
  %v61 = vld [vmem:[%s11 + $0x18] sm:$0xff]
  %v62 = vld [vmem:[%s11 + $0x20] sm:$0xff]
  %v63 = vld [vmem:[%s11 + $0x28] sm:$0xff]
  %v64 = vld [vmem:[%s11 + $0x30] sm:$0xff]
  %v65 = vld [vmem:[%s11 + $0x38] sm:$0xff]
  %v66 = vld [vmem:[%s11 + $0x40] sm:$0xff]
  %v67 = vld [vmem:[%s11 + $0x48] sm:$0xff]
  %v68 = vld [vmem:[%s11 + $0x50] sm:$0xff]
  %v69 = vld [vmem:[%s11 + $0x58] sm:$0xff]
  %v70 = vld [vmem:[%s11 + $0x60] sm:$0xff]
  %v71 = vld [vmem:[%s11 + $0x68] sm:$0xff]
  %v72 = vld [vmem:[%s11 + $0x70] sm:$0xff]
  %v73 = vld [vmem:[%s11 + $0x78] sm:$0xff]
  %v74 = vld [vmem:[%s12] sm:$0x1]
  %v75 = vld [vmem:[%s5] sm:$0xff]
  %s76 = scalar_lea.vmem %s5, 8
  %v77 = vld [vmem:[%s76] sm:$0xff]
  %s78 = scalar_lea.vmem %s5, 16
  %v79 = vld [vmem:[%s78] sm:$0xff]
  %s80 = scalar_lea.vmem %s5, 24
  %v81 = vld [vmem:[%s80] sm:$0xff]
  %v82 = vld [vmem:[%s0] sm:$0xff]
  %v83 = vld [vmem:[%s0 + $0x8] sm:$0xff]
  %v84 = vld [vmem:[%s0 + $0x10] sm:$0x3]
  %vm85 = vcmask 261120
  %v86 = vsel %vm85, %v82, 0.0
  %87 = vadd.xlane.f32.xlu0 %v86
  %v88 = vpop.xlane.xlu0 %87
  %v89 = vsel %vm85, %v83, 0.0
  %90 = vadd.xlane.f32.xlu0 %v89
  %v91 = vpop.xlane.xlu0 %90
  %vm92 = vcmask 254976
  %v93 = vsel %vm92, %v84, 0.0
  %94 = vadd.xlane.f32.xlu0 %v93
  %v95 = vpop.xlane.xlu0 %94
  %v96 = vmul.f32 %v82, %v82
  %v97 = vmul.f32 %v83, %v83
  %v98 = vmul.f32 %v84, %v84
  %v99 = vsel %vm85, %v96, 0.0
  %100 = vadd.xlane.f32.xlu0 %v99
  %v101 = vpop.xlane.xlu0 %100
  %v102 = vsel %vm85, %v97, 0.0
  %103 = vadd.xlane.f32.xlu0 %v102
  %v104 = vpop.xlane.xlu0 %103
  %v105 = vsel %vm92, %v98, 0.0
  %106 = vadd.xlane.f32.xlu0 %v105
  %v107 = vpop.xlane.xlu0 %106
  %v108 = vmul.f32 %v88, 0.03125
  %v109 = vmul.f32 %v91, 0.03125
  %v110 = vmul.f32 %v95, 0.03125
  %v111 = vmul.f32 %v101, 0.03125
  %v112 = vmul.f32 %v104, 0.03125
  %v113 = vmul.f32 %v107, 0.03125
  %v114 = vmul.f32 %v108, %v108
  %v115 = vmul.f32 %v109, %v109
  %v116 = vmul.f32 %v110, %v110
  %v117 = vsub.f32 %v111, %v114
  %v118 = vsub.f32 %v112, %v115
  %v119 = vsub.f32 %v113, %v116
  %v120 = vsub.f32 %v82, %v108
  %v121 = vsub.f32 %v83, %v109
  %v122 = vsub.f32 %v84, %v110
  %v123 = vadd.f32 %v117, 1e-05
  %v124 = vadd.f32 %v118, 1e-05
  %v125 = vadd.f32 %v119, 1e-05
  %v126 = vrsqrt.pop %v123
  %v127 = vmul.f32 %v126, %v123
  %v128 = vmul.f32 %v127, %v126
  %v129 = vmul.f32 0.5, %v128
  %v130 = vsub.f32 1.5, %v129
  %v131 = vmul.f32 %v126, %v130
  %vm132 = vweird.f32 %v123
  %vm133 = vweird.f32 %v126
  %vm134 = vmor %vm132, %vm133
  %v135 = vsel %vm134, %v126, %v131
  %v136 = vrsqrt.pop %v124
  %v137 = vmul.f32 %v136, %v124
  %v138 = vmul.f32 %v137, %v136
  %v139 = vmul.f32 0.5, %v138
  %v140 = vsub.f32 1.5, %v139
  %v141 = vmul.f32 %v136, %v140
  %vm142 = vweird.f32 %v124
  %vm143 = vweird.f32 %v136
  %vm144 = vmor %vm142, %vm143
  %v145 = vsel %vm144, %v136, %v141
  %v146 = vrsqrt.pop %v125
  %v147 = vmul.f32 %v146, %v125
  %v148 = vmul.f32 %v147, %v146
  %v149 = vmul.f32 0.5, %v148
  %v150 = vsub.f32 1.5, %v149
  %v151 = vmul.f32 %v146, %v150
  %vm152 = vweird.f32 %v125
  %vm153 = vweird.f32 %v146
  %vm154 = vmor %vm152, %vm153
  %v155 = vsel %vm154, %v146, %v151
  %v156 = vmul.f32 %v120, %v135
  %v157 = vmul.f32 %v121, %v145
  %v158 = vmul.f32 %v122, %v155
  %v160 = vperm.slane %v48, 0
  %v162 = vmul.f32 %v156, %v160
  %v163 = vmul.f32 %v157, %v160
  %v164 = vmul.f32 %v158, %v160
  %v166 = vperm.slane %v49, 0
  %v168 = vadd.f32 %v162, %v166
  %v169 = vadd.f32 %v163, %v166
  %v170 = vadd.f32 %v164, %v166
  %v171 = vld [vmem:[%s4] sm:$0xff]
  %v172 = vld [vmem:[%s4 + $0x8] sm:$0xff]
  %v173 = vld [vmem:[%s4 + $0x10] sm:$0xff]
  %v174 = vld [vmem:[%s4 + $0x18] sm:$0xff]
  %v176 = vsel %vm85, %v168, 0
  %v179 = vsel %vm85, %v169, 0
  %v182 = vsel %vm85, %v170, 0
  %184 = vmatpush.msra.mxu0 0.0
  %185 = vmatpush.msra.mxu0 0.0
  %186 = vmatpush.msra.mxu0 0.0
  %187 = vmatpush.msra.mxu0 0.0
  %188 = vmatpush.msra.mxu0 0.0
  %189 = vmatpush.msra.mxu0 0.0
  %190 = vmatpush.msra.mxu0 0.0
  %191 = vmatpush.msra.mxu0 0.0
  %192 = vmatpush.msra.mxu0 0.0
  %193 = vmatpush.msra.mxu0 0.0
  %194 = vmatpush.msra.mxu0 0.0
  %195 = vmatpush.msra.mxu0 0.0
  %196 = vmatpush.msra.mxu0 %v174
  %197 = vmatpush.msra.mxu0 %v173
  %198 = vmatpush.msra.mxu0 %v172
  %199 = vmatpush.msra.mxu0 %v171
  %200 = vmatmul.f32.gmra.mxu0 %v176
  %v201 = vpop.f32.mrf.mxu0
  %v202 = vadd.f32 0.0, %v201
  %203 = vmatmul.f32.gmra.mxu0 %v179
  %v204 = vpop.f32.mrf.mxu0
  %v205 = vadd.f32 0.0, %v204
  %206 = vmatmul.f32.gmra.mxu0 %v182
  %v207 = vpop.f32.mrf.mxu0
  %v208 = vadd.f32 0.0, %v207
  %209 = vdwg.mxu0
  %212 = vrot.lane.b32.xlu0 %v202, 96
  %v213 = vpop.permute.xlu0 %212
  %214 = vrot.lane.b32.xlu0 %v205, 96
  %v215 = vpop.permute.xlu0 %214
  %vm216 = vcmask 64512
  %v217 = vsel %vm216, %v202, 0
  %v219 = vsel %vm216, %v205, 0
  %v221 = vsel %vm216, %v213, 0
  %v223 = vsel %vm216, %v215, 0
  %225 = vmatpush.xpose.msra.mxu0 0.0
  %226 = vmatpush.xpose.msra.mxu0 0.0
  %227 = vmatpush.xpose.msra.mxu0 0.0
  %228 = vmatpush.xpose.msra.mxu0 0.0
  %229 = vmatpush.xpose.msra.mxu0 0.0
  %230 = vmatpush.xpose.msra.mxu0 0.0
  %231 = vmatpush.xpose.msra.mxu0 0.0
  %232 = vmatpush.xpose.msra.mxu0 0.0
  %233 = vmatpush.xpose.msra.mxu0 0.0
  %234 = vmatpush.xpose.msra.mxu0 0.0
  %235 = vmatpush.xpose.msra.mxu0 0.0
  %236 = vmatpush.xpose.msra.mxu0 0.0
  %237 = vmatpush.xpose.msra.mxu0 0.0
  %238 = vmatpush.xpose.msra.mxu0 0.0
  %239 = vmatpush.xpose.msra.mxu0 %v223
  %240 = vmatpush.xpose.msra.mxu0 %v221
  %241 = vmatmul.f32.gmra.mxu0 %v217
  %v242 = vpop.f32.mrf.mxu0
  %v243 = vadd.f32 0.0, %v242
  %244 = vmatmul.f32.gmra.mxu0 %v219
  %v245 = vpop.f32.mrf.mxu0
  %v246 = vadd.f32 0.0, %v245
  %247 = vdwg.mxu0
  %v248 = vmul.f32 %v243, 0.35355338
  %v249 = vmul.f32 %v246, 0.35355338
  %v250 = vadd.f32 %v248, %v46
  %v251 = vadd.f32 %v249, %v47
  %vm252 = vcmask 72704
  %v253 = vsel %vm252, %v250, -inf
  %254 = vmax.xlane.f32.xlu0 %v253
  %v255 = vpop.xlane.xlu0 %254
  %vm256 = vcmask 65536
  %v257 = vsel %vm256, %v251, -inf
  %258 = vmax.xlane.f32.xlu0 %v257
  %v259 = vpop.xlane.xlu0 %258
  %v260 = vsub.f32 %v250, %v255
  %v261 = vsub.f32 %v251, %v259
  %v262 = vmul.f32 %v260, 1.442695
  %v263 = vpow.pop %v262
  %v264 = vmul.f32 %v261, 1.442695
  %v265 = vpow.pop %v264
  %v266 = vsel %vm252, %v263, 0.0
  %267 = vadd.xlane.f32.xlu0 %v266
  %v268 = vpop.xlane.xlu0 %267
  %v269 = vsel %vm256, %v265, 0.0
  %270 = vadd.xlane.f32.xlu0 %v269
  %v271 = vpop.xlane.xlu0 %270
  %v272 = vrcp.pop %v268
  %v273 = vmul.f32 %v268, %v272
  %v274 = vsub.f32 1.0, %v273
  %v275 = vmul.f32 %v272, %v274
  %v276 = vadd.f32 %v272, %v275
  %vm277 = vweird.f32 %v268
  %vm278 = vweird.f32 %v272
  %vm279 = vmor %vm277, %vm278
  %v280 = vsel %vm279, %v272, %v276
  %v281 = vand.u32 2147483647, %v268
  %vm282 = vcmp.eq.f32.partialorder %v281, 8.507059e+37
  %v283 = vand.u32 %v268, 2147483648
  %v284 = vor.u32 1.1754944e-38, %v283
  %v285 = vsel %vm282, %v284, %v280
  %v286 = vrcp.pop %v271
  %v287 = vmul.f32 %v271, %v286
  %v288 = vsub.f32 1.0, %v287
  %v289 = vmul.f32 %v286, %v288
  %v290 = vadd.f32 %v286, %v289
  %vm291 = vweird.f32 %v271
  %vm292 = vweird.f32 %v286
  %vm293 = vmor %vm291, %vm292
  %v294 = vsel %vm293, %v286, %v290
  %v295 = vand.u32 2147483647, %v271
  %vm296 = vcmp.eq.f32.partialorder %v295, 8.507059e+37
  %v297 = vand.u32 %v271, 2147483648
  %v298 = vor.u32 1.1754944e-38, %v297
  %v299 = vsel %vm296, %v298, %v294
  %v300 = vmul.f32 %v263, %v285
  %v301 = vmul.f32 %v265, %v299
  %302 = vrot.lane.b32.xlu0 %v202, 64
  %v303 = vpop.permute.xlu0 %302
  %304 = vrot.lane.b32.xlu0 %v205, 64
  %v305 = vpop.permute.xlu0 %304
  %v308 = vsel %vm252, %v300, 0
  %v311 = vsel %vm252, %v301, 0
  %vm313 = vcmask 1040384
  %v314 = vsel %vm313, %v305, 0
  %316 = vmatpush.msra.mxu0 0.0
  %317 = vmatpush.msra.mxu0 0.0
  %318 = vmatpush.msra.mxu0 0.0
  %319 = vmatpush.msra.mxu0 0.0
  %320 = vmatpush.msra.mxu0 0.0
  %321 = vmatpush.msra.mxu0 0.0
  %322 = vmatpush.msra.mxu0 0.0
  %323 = vmatpush.msra.mxu0 0.0
  %324 = vmatpush.msra.mxu0 0.0
  %325 = vmatpush.msra.mxu0 0.0
  %326 = vmatpush.msra.mxu0 0.0
  %327 = vmatpush.msra.mxu0 0.0
  %328 = vmatpush.msra.mxu0 0.0
  %329 = vmatpush.msra.mxu0 0.0
  %330 = vmatpush.msra.mxu0 %v314
  %331 = vmatpush.msra.mxu0 %v303
  %332 = vmatmul.f32.gmra.mxu0 %v308
  %v333 = vpop.f32.mrf.mxu0
  %v334 = vadd.f32 0.0, %v333
  %335 = vmatmul.f32.gmra.mxu0 %v311
  %v336 = vpop.f32.mrf.mxu0
  %v337 = vadd.f32 0.0, %v336
  %338 = vdwg.mxu0
  %339 = vrot.lane.b32.xlu0 %v202, 120
  %v340 = vpop.permute.xlu0 %339
  %341 = vrot.lane.b32.xlu0 %v205, 120
  %v342 = vpop.permute.xlu0 %341
  %343 = vrot.lane.b32.xlu0 %v202, 88
  %v344 = vpop.permute.xlu0 %343
  %345 = vrot.lane.b32.xlu0 %v205, 88
  %v346 = vpop.permute.xlu0 %345
  %v347 = vsel %vm216, %v340, 0
  %v349 = vsel %vm216, %v342, 0
  %v351 = vsel %vm216, %v344, 0
  %v353 = vsel %vm216, %v346, 0
  %355 = vmatpush.xpose.msra.mxu0 0.0
  %356 = vmatpush.xpose.msra.mxu0 0.0
  %357 = vmatpush.xpose.msra.mxu0 0.0
  %358 = vmatpush.xpose.msra.mxu0 0.0
  %359 = vmatpush.xpose.msra.mxu0 0.0
  %360 = vmatpush.xpose.msra.mxu0 0.0
  %361 = vmatpush.xpose.msra.mxu0 0.0
  %362 = vmatpush.xpose.msra.mxu0 0.0
  %363 = vmatpush.xpose.msra.mxu0 0.0
  %364 = vmatpush.xpose.msra.mxu0 0.0
  %365 = vmatpush.xpose.msra.mxu0 0.0
  %366 = vmatpush.xpose.msra.mxu0 0.0
  %367 = vmatpush.xpose.msra.mxu0 0.0
  %368 = vmatpush.xpose.msra.mxu0 0.0
  %369 = vmatpush.xpose.msra.mxu0 %v353
  %370 = vmatpush.xpose.msra.mxu0 %v351
  %371 = vmatmul.f32.gmra.mxu0 %v347
  %v372 = vpop.f32.mrf.mxu0
  %v373 = vadd.f32 0.0, %v372
  %374 = vmatmul.f32.gmra.mxu0 %v349
  %v375 = vpop.f32.mrf.mxu0
  %v376 = vadd.f32 0.0, %v375
  %377 = vdwg.mxu0
  %v378 = vmul.f32 %v373, 0.35355338
  %v379 = vmul.f32 %v376, 0.35355338
  %v380 = vadd.f32 %v378, %v46
  %v381 = vadd.f32 %v379, %v47
  %v382 = vsel %vm252, %v380, -inf
  %383 = vmax.xlane.f32.xlu0 %v382
  %v384 = vpop.xlane.xlu0 %383
  %v385 = vsel %vm256, %v381, -inf
  %386 = vmax.xlane.f32.xlu0 %v385
  %v387 = vpop.xlane.xlu0 %386
  %v388 = vsub.f32 %v380, %v384
  %v389 = vsub.f32 %v381, %v387
  %v390 = vmul.f32 %v388, 1.442695
  %v391 = vpow.pop %v390
  %v392 = vmul.f32 %v389, 1.442695
  %v393 = vpow.pop %v392
  %v394 = vsel %vm252, %v391, 0.0
  %395 = vadd.xlane.f32.xlu0 %v394
  %v396 = vpop.xlane.xlu0 %395
  %v397 = vsel %vm256, %v393, 0.0
  %398 = vadd.xlane.f32.xlu0 %v397
  %v399 = vpop.xlane.xlu0 %398
  %v400 = vrcp.pop %v396
  %v401 = vmul.f32 %v396, %v400
  %v402 = vsub.f32 1.0, %v401
  %v403 = vmul.f32 %v400, %v402
  %v404 = vadd.f32 %v400, %v403
  %vm405 = vweird.f32 %v396
  %vm406 = vweird.f32 %v400
  %vm407 = vmor %vm405, %vm406
  %v408 = vsel %vm407, %v400, %v404
  %v409 = vand.u32 2147483647, %v396
  %vm410 = vcmp.eq.f32.partialorder %v409, 8.507059e+37
  %v411 = vand.u32 %v396, 2147483648
  %v412 = vor.u32 1.1754944e-38, %v411
  %v413 = vsel %vm410, %v412, %v408
  %v414 = vrcp.pop %v399
  %v415 = vmul.f32 %v399, %v414
  %v416 = vsub.f32 1.0, %v415
  %v417 = vmul.f32 %v414, %v416
  %v418 = vadd.f32 %v414, %v417
  %vm419 = vweird.f32 %v399
  %vm420 = vweird.f32 %v414
  %vm421 = vmor %vm419, %vm420
  %v422 = vsel %vm421, %v414, %v418
  %v423 = vand.u32 2147483647, %v399
  %vm424 = vcmp.eq.f32.partialorder %v423, 8.507059e+37
  %v425 = vand.u32 %v399, 2147483648
  %v426 = vor.u32 1.1754944e-38, %v425
  %v427 = vsel %vm424, %v426, %v422
  %v428 = vmul.f32 %v391, %v413
  %v429 = vmul.f32 %v393, %v427
  %430 = vrot.lane.b32.xlu0 %v202, 56
  %v431 = vpop.permute.xlu0 %430
  %432 = vrot.lane.b32.xlu0 %v205, 56
  %v433 = vpop.permute.xlu0 %432
  %v436 = vsel %vm252, %v428, 0
  %v439 = vsel %vm252, %v429, 0
  %v441 = vsel %vm313, %v433, 0
  %443 = vmatpush.msra.mxu0 0.0
  %444 = vmatpush.msra.mxu0 0.0
  %445 = vmatpush.msra.mxu0 0.0
  %446 = vmatpush.msra.mxu0 0.0
  %447 = vmatpush.msra.mxu0 0.0
  %448 = vmatpush.msra.mxu0 0.0
  %449 = vmatpush.msra.mxu0 0.0
  %450 = vmatpush.msra.mxu0 0.0
  %451 = vmatpush.msra.mxu0 0.0
  %452 = vmatpush.msra.mxu0 0.0
  %453 = vmatpush.msra.mxu0 0.0
  %454 = vmatpush.msra.mxu0 0.0
  %455 = vmatpush.msra.mxu0 0.0
  %456 = vmatpush.msra.mxu0 0.0
  %457 = vmatpush.msra.mxu0 %v441
  %458 = vmatpush.msra.mxu0 %v431
  %459 = vmatmul.f32.gmra.mxu0 %v436
  %v460 = vpop.f32.mrf.mxu0
  %v461 = vadd.f32 0.0, %v460
  %462 = vmatmul.f32.gmra.mxu0 %v439
  %v463 = vpop.f32.mrf.mxu0
  %v464 = vadd.f32 0.0, %v463
  %465 = vdwg.mxu0
  %v467 = vsel %vm216, %v461, 0
  %v470 = vsel %vm216, %v464, 0
  %472 = vmatpush.msra.mxu0 0.0
  %473 = vmatpush.msra.mxu0 0.0
  %474 = vmatpush.msra.mxu0 0.0
  %475 = vmatpush.msra.mxu0 0.0
  %476 = vmatpush.msra.mxu0 0.0
  %477 = vmatpush.msra.mxu0 0.0
  %478 = vmatpush.msra.mxu0 0.0
  %479 = vmatpush.msra.mxu0 0.0
  %480 = vmatpush.msra.mxu0 0.0
  %481 = vmatpush.msra.mxu0 0.0
  %482 = vmatpush.msra.mxu0 0.0
  %483 = vmatpush.msra.mxu0 0.0
  %484 = vmatpush.msra.mxu0 0.0
  %485 = vmatpush.msra.mxu0 0.0
  %486 = vmatpush.msra.mxu0 0.0
  %487 = vmatpush.msra.mxu0 %v77
  %488 = vmatmul.f32.gmra.mxu0 %v467
  %v489 = vpop.f32.mrf.mxu0
  %v490 = vadd.f32 0.0, %v489
  %491 = vmatmul.f32.gmra.mxu0 %v470
  %v492 = vpop.f32.mrf.mxu0
  %v493 = vadd.f32 0.0, %v492
  %494 = vdwg.mxu0
  %v496 = vsel %vm216, %v334, 0
  %v499 = vsel %vm216, %v337, 0
  %501 = vmatpush.msra.mxu0 0.0
  %502 = vmatpush.msra.mxu0 0.0
  %503 = vmatpush.msra.mxu0 0.0
  %504 = vmatpush.msra.mxu0 0.0
  %505 = vmatpush.msra.mxu0 0.0
  %506 = vmatpush.msra.mxu0 0.0
  %507 = vmatpush.msra.mxu0 0.0
  %508 = vmatpush.msra.mxu0 0.0
  %509 = vmatpush.msra.mxu0 0.0
  %510 = vmatpush.msra.mxu0 0.0
  %511 = vmatpush.msra.mxu0 0.0
  %512 = vmatpush.msra.mxu0 0.0
  %513 = vmatpush.msra.mxu0 0.0
  %514 = vmatpush.msra.mxu0 0.0
  %515 = vmatpush.msra.mxu0 0.0
  %516 = vmatpush.msra.mxu0 %v75
  %517 = vmatmul.f32.gmra.mxu0 %v496
  %v518 = vpop.f32.mrf.mxu0
  %v519 = vadd.f32 %v490, %v518
  %520 = vmatmul.f32.gmra.mxu0 %v499
  %v521 = vpop.f32.mrf.mxu0
  %v522 = vadd.f32 %v493, %v521
  %523 = vdwg.mxu0
  %524 = vrot.lane.b32.xlu0 %v202, 112
  %v525 = vpop.permute.xlu0 %524
  %526 = vrot.lane.b32.xlu0 %v205, 112
  %v527 = vpop.permute.xlu0 %526
  %528 = vrot.lane.b32.xlu0 %v202, 80
  %v529 = vpop.permute.xlu0 %528
  %530 = vrot.lane.b32.xlu0 %v205, 80
  %v531 = vpop.permute.xlu0 %530
  %v532 = vsel %vm216, %v525, 0
  %v534 = vsel %vm216, %v527, 0
  %v536 = vsel %vm216, %v529, 0
  %v538 = vsel %vm216, %v531, 0
  %540 = vmatpush.xpose.msra.mxu0 0.0
  %541 = vmatpush.xpose.msra.mxu0 0.0
  %542 = vmatpush.xpose.msra.mxu0 0.0
  %543 = vmatpush.xpose.msra.mxu0 0.0
  %544 = vmatpush.xpose.msra.mxu0 0.0
  %545 = vmatpush.xpose.msra.mxu0 0.0
  %546 = vmatpush.xpose.msra.mxu0 0.0
  %547 = vmatpush.xpose.msra.mxu0 0.0
  %548 = vmatpush.xpose.msra.mxu0 0.0
  %549 = vmatpush.xpose.msra.mxu0 0.0
  %550 = vmatpush.xpose.msra.mxu0 0.0
  %551 = vmatpush.xpose.msra.mxu0 0.0
  %552 = vmatpush.xpose.msra.mxu0 0.0
  %553 = vmatpush.xpose.msra.mxu0 0.0
  %554 = vmatpush.xpose.msra.mxu0 %v538
  %555 = vmatpush.xpose.msra.mxu0 %v536
  %556 = vmatmul.f32.gmra.mxu0 %v532
  %v557 = vpop.f32.mrf.mxu0
  %v558 = vadd.f32 0.0, %v557
  %559 = vmatmul.f32.gmra.mxu0 %v534
  %v560 = vpop.f32.mrf.mxu0
  %v561 = vadd.f32 0.0, %v560
  %562 = vdwg.mxu0
  %v563 = vmul.f32 %v558, 0.35355338
  %v564 = vmul.f32 %v561, 0.35355338
  %v565 = vadd.f32 %v563, %v46
  %v566 = vadd.f32 %v564, %v47
  %v567 = vsel %vm252, %v565, -inf
  %568 = vmax.xlane.f32.xlu0 %v567
  %v569 = vpop.xlane.xlu0 %568
  %v570 = vsel %vm256, %v566, -inf
  %571 = vmax.xlane.f32.xlu0 %v570
  %v572 = vpop.xlane.xlu0 %571
  %v573 = vsub.f32 %v565, %v569
  %v574 = vsub.f32 %v566, %v572
  %v575 = vmul.f32 %v573, 1.442695
  %v576 = vpow.pop %v575
  %v577 = vmul.f32 %v574, 1.442695
  %v578 = vpow.pop %v577
  %v579 = vsel %vm252, %v576, 0.0
  %580 = vadd.xlane.f32.xlu0 %v579
  %v581 = vpop.xlane.xlu0 %580
  %v582 = vsel %vm256, %v578, 0.0
  %583 = vadd.xlane.f32.xlu0 %v582
  %v584 = vpop.xlane.xlu0 %583
  %v585 = vrcp.pop %v581
  %v586 = vmul.f32 %v581, %v585
  %v587 = vsub.f32 1.0, %v586
  %v588 = vmul.f32 %v585, %v587
  %v589 = vadd.f32 %v585, %v588
  %vm590 = vweird.f32 %v581
  %vm591 = vweird.f32 %v585
  %vm592 = vmor %vm590, %vm591
  %v593 = vsel %vm592, %v585, %v589
  %v594 = vand.u32 2147483647, %v581
  %vm595 = vcmp.eq.f32.partialorder %v594, 8.507059e+37
  %v596 = vand.u32 %v581, 2147483648
  %v597 = vor.u32 1.1754944e-38, %v596
  %v598 = vsel %vm595, %v597, %v593
  %v599 = vrcp.pop %v584
  %v600 = vmul.f32 %v584, %v599
  %v601 = vsub.f32 1.0, %v600
  %v602 = vmul.f32 %v599, %v601
  %v603 = vadd.f32 %v599, %v602
  %vm604 = vweird.f32 %v584
  %vm605 = vweird.f32 %v599
  %vm606 = vmor %vm604, %vm605
  %v607 = vsel %vm606, %v599, %v603
  %v608 = vand.u32 2147483647, %v584
  %vm609 = vcmp.eq.f32.partialorder %v608, 8.507059e+37
  %v610 = vand.u32 %v584, 2147483648
  %v611 = vor.u32 1.1754944e-38, %v610
  %v612 = vsel %vm609, %v611, %v607
  %v613 = vmul.f32 %v576, %v598
  %v614 = vmul.f32 %v578, %v612
  %615 = vrot.lane.b32.xlu0 %v202, 48
  %v616 = vpop.permute.xlu0 %615
  %617 = vrot.lane.b32.xlu0 %v205, 48
  %v618 = vpop.permute.xlu0 %617
  %v621 = vsel %vm252, %v613, 0
  %v624 = vsel %vm252, %v614, 0
  %v626 = vsel %vm313, %v618, 0
  %628 = vmatpush.msra.mxu0 0.0
  %629 = vmatpush.msra.mxu0 0.0
  %630 = vmatpush.msra.mxu0 0.0
  %631 = vmatpush.msra.mxu0 0.0
  %632 = vmatpush.msra.mxu0 0.0
  %633 = vmatpush.msra.mxu0 0.0
  %634 = vmatpush.msra.mxu0 0.0
  %635 = vmatpush.msra.mxu0 0.0
  %636 = vmatpush.msra.mxu0 0.0
  %637 = vmatpush.msra.mxu0 0.0
  %638 = vmatpush.msra.mxu0 0.0
  %639 = vmatpush.msra.mxu0 0.0
  %640 = vmatpush.msra.mxu0 0.0
  %641 = vmatpush.msra.mxu0 0.0
  %642 = vmatpush.msra.mxu0 %v626
  %643 = vmatpush.msra.mxu0 %v616
  %644 = vmatmul.f32.gmra.mxu0 %v621
  %v645 = vpop.f32.mrf.mxu0
  %v646 = vadd.f32 0.0, %v645
  %647 = vmatmul.f32.gmra.mxu0 %v624
  %v648 = vpop.f32.mrf.mxu0
  %v649 = vadd.f32 0.0, %v648
  %650 = vdwg.mxu0
  %v652 = vsel %vm216, %v646, 0
  %v655 = vsel %vm216, %v649, 0
  %657 = vmatpush.msra.mxu0 0.0
  %658 = vmatpush.msra.mxu0 0.0
  %659 = vmatpush.msra.mxu0 0.0
  %660 = vmatpush.msra.mxu0 0.0
  %661 = vmatpush.msra.mxu0 0.0
  %662 = vmatpush.msra.mxu0 0.0
  %663 = vmatpush.msra.mxu0 0.0
  %664 = vmatpush.msra.mxu0 0.0
  %665 = vmatpush.msra.mxu0 0.0
  %666 = vmatpush.msra.mxu0 0.0
  %667 = vmatpush.msra.mxu0 0.0
  %668 = vmatpush.msra.mxu0 0.0
  %669 = vmatpush.msra.mxu0 0.0
  %670 = vmatpush.msra.mxu0 0.0
  %671 = vmatpush.msra.mxu0 0.0
  %672 = vmatpush.msra.mxu0 %v79
  %673 = vmatmul.f32.gmra.mxu0 %v652
  %v674 = vpop.f32.mrf.mxu0
  %v675 = vadd.f32 0.0, %v674
  %676 = vmatmul.f32.gmra.mxu0 %v655
  %v677 = vpop.f32.mrf.mxu0
  %v678 = vadd.f32 0.0, %v677
  %679 = vdwg.mxu0
  %v680 = vadd.f32 %v519, %v675
  %v681 = vadd.f32 %v522, %v678
  %682 = vrot.lane.b32.xlu0 %v202, 104
  %v683 = vpop.permute.xlu0 %682
  %684 = vrot.lane.b32.xlu0 %v205, 104
  %v685 = vpop.permute.xlu0 %684
  %686 = vrot.lane.b32.xlu0 %v202, 72
  %v687 = vpop.permute.xlu0 %686
  %688 = vrot.lane.b32.xlu0 %v205, 72
  %v689 = vpop.permute.xlu0 %688
  %v690 = vsel %vm216, %v683, 0
  %v692 = vsel %vm216, %v685, 0
  %v694 = vsel %vm216, %v687, 0
  %v696 = vsel %vm216, %v689, 0
  %698 = vmatpush.xpose.msra.mxu0 0.0
  %699 = vmatpush.xpose.msra.mxu0 0.0
  %700 = vmatpush.xpose.msra.mxu0 0.0
  %701 = vmatpush.xpose.msra.mxu0 0.0
  %702 = vmatpush.xpose.msra.mxu0 0.0
  %703 = vmatpush.xpose.msra.mxu0 0.0
  %704 = vmatpush.xpose.msra.mxu0 0.0
  %705 = vmatpush.xpose.msra.mxu0 0.0
  %706 = vmatpush.xpose.msra.mxu0 0.0
  %707 = vmatpush.xpose.msra.mxu0 0.0
  %708 = vmatpush.xpose.msra.mxu0 0.0
  %709 = vmatpush.xpose.msra.mxu0 0.0
  %710 = vmatpush.xpose.msra.mxu0 0.0
  %711 = vmatpush.xpose.msra.mxu0 0.0
  %712 = vmatpush.xpose.msra.mxu0 %v696
  %713 = vmatpush.xpose.msra.mxu0 %v694
  %714 = vmatmul.f32.gmra.mxu0 %v690
  %v715 = vpop.f32.mrf.mxu0
  %v716 = vadd.f32 0.0, %v715
  %717 = vmatmul.f32.gmra.mxu0 %v692
  %v718 = vpop.f32.mrf.mxu0
  %v719 = vadd.f32 0.0, %v718
  %720 = vdwg.mxu0
  %v721 = vmul.f32 %v716, 0.35355338
  %v722 = vmul.f32 %v719, 0.35355338
  %v723 = vadd.f32 %v721, %v46
  %v724 = vadd.f32 %v722, %v47
  %v725 = vsel %vm252, %v723, -inf
  %726 = vmax.xlane.f32.xlu0 %v725
  %v727 = vpop.xlane.xlu0 %726
  %v728 = vsel %vm256, %v724, -inf
  %729 = vmax.xlane.f32.xlu0 %v728
  %v730 = vpop.xlane.xlu0 %729
  %v731 = vsub.f32 %v723, %v727
  %v732 = vsub.f32 %v724, %v730
  %v733 = vmul.f32 %v731, 1.442695
  %v734 = vpow.pop %v733
  %v735 = vmul.f32 %v732, 1.442695
  %v736 = vpow.pop %v735
  %v737 = vsel %vm252, %v734, 0.0
  %738 = vadd.xlane.f32.xlu0 %v737
  %v739 = vpop.xlane.xlu0 %738
  %v740 = vsel %vm256, %v736, 0.0
  %741 = vadd.xlane.f32.xlu0 %v740
  %v742 = vpop.xlane.xlu0 %741
  %v743 = vrcp.pop %v739
  %v744 = vmul.f32 %v739, %v743
  %v745 = vsub.f32 1.0, %v744
  %v746 = vmul.f32 %v743, %v745
  %v747 = vadd.f32 %v743, %v746
  %vm748 = vweird.f32 %v739
  %vm749 = vweird.f32 %v743
  %vm750 = vmor %vm748, %vm749
  %v751 = vsel %vm750, %v743, %v747
  %v752 = vand.u32 2147483647, %v739
  %vm753 = vcmp.eq.f32.partialorder %v752, 8.507059e+37
  %v754 = vand.u32 %v739, 2147483648
  %v755 = vor.u32 1.1754944e-38, %v754
  %v756 = vsel %vm753, %v755, %v751
  %v757 = vrcp.pop %v742
  %v758 = vmul.f32 %v742, %v757
  %v759 = vsub.f32 1.0, %v758
  %v760 = vmul.f32 %v757, %v759
  %v761 = vadd.f32 %v757, %v760
  %vm762 = vweird.f32 %v742
  %vm763 = vweird.f32 %v757
  %vm764 = vmor %vm762, %vm763
  %v765 = vsel %vm764, %v757, %v761
  %v766 = vand.u32 2147483647, %v742
  %vm767 = vcmp.eq.f32.partialorder %v766, 8.507059e+37
  %v768 = vand.u32 %v742, 2147483648
  %v769 = vor.u32 1.1754944e-38, %v768
  %v770 = vsel %vm767, %v769, %v765
  %v771 = vmul.f32 %v734, %v756
  %v772 = vmul.f32 %v736, %v770
  %773 = vrot.lane.b32.xlu0 %v202, 40
  %v774 = vpop.permute.xlu0 %773
  %775 = vrot.lane.b32.xlu0 %v205, 40
  %v776 = vpop.permute.xlu0 %775
  %v779 = vsel %vm252, %v771, 0
  %v782 = vsel %vm252, %v772, 0
  %v784 = vsel %vm313, %v776, 0
  %786 = vmatpush.msra.mxu0 0.0
  %787 = vmatpush.msra.mxu0 0.0
  %788 = vmatpush.msra.mxu0 0.0
  %789 = vmatpush.msra.mxu0 0.0
  %790 = vmatpush.msra.mxu0 0.0
  %791 = vmatpush.msra.mxu0 0.0
  %792 = vmatpush.msra.mxu0 0.0
  %793 = vmatpush.msra.mxu0 0.0
  %794 = vmatpush.msra.mxu0 0.0
  %795 = vmatpush.msra.mxu0 0.0
  %796 = vmatpush.msra.mxu0 0.0
  %797 = vmatpush.msra.mxu0 0.0
  %798 = vmatpush.msra.mxu0 0.0
  %799 = vmatpush.msra.mxu0 0.0
  %800 = vmatpush.msra.mxu0 %v784
  %801 = vmatpush.msra.mxu0 %v774
  %802 = vmatmul.f32.gmra.mxu0 %v779
  %v803 = vpop.f32.mrf.mxu0
  %v804 = vadd.f32 0.0, %v803
  %805 = vmatmul.f32.gmra.mxu0 %v782
  %v806 = vpop.f32.mrf.mxu0
  %v807 = vadd.f32 0.0, %v806
  %808 = vdwg.mxu0
  %v810 = vsel %vm216, %v804, 0
  %v813 = vsel %vm216, %v807, 0
  %815 = vmatpush.msra.mxu0 0.0
  %816 = vmatpush.msra.mxu0 0.0
  %817 = vmatpush.msra.mxu0 0.0
  %818 = vmatpush.msra.mxu0 0.0
  %819 = vmatpush.msra.mxu0 0.0
  %820 = vmatpush.msra.mxu0 0.0
  %821 = vmatpush.msra.mxu0 0.0
  %822 = vmatpush.msra.mxu0 0.0
  %823 = vmatpush.msra.mxu0 0.0
  %824 = vmatpush.msra.mxu0 0.0
  %825 = vmatpush.msra.mxu0 0.0
  %826 = vmatpush.msra.mxu0 0.0
  %827 = vmatpush.msra.mxu0 0.0
  %828 = vmatpush.msra.mxu0 0.0
  %829 = vmatpush.msra.mxu0 0.0
  %830 = vmatpush.msra.mxu0 %v81
  %831 = vmatmul.f32.gmra.mxu0 %v810
  %v832 = vpop.f32.mrf.mxu0
  %v833 = vadd.f32 0.0, %v832
  %834 = vmatmul.f32.gmra.mxu0 %v813
  %v835 = vpop.f32.mrf.mxu0
  %v836 = vadd.f32 0.0, %v835
  %837 = vdwg.mxu0
  %v838 = vadd.f32 %v680, %v833
  %v839 = vadd.f32 %v681, %v836
  %v840 = vadd.f32 %v82, %v838
  %v841 = vadd.f32 %v83, %v839
  %v843 = vperm.slane %v52, 0
  %v845 = vadd.f32 %v840, %v843
  %v846 = vadd.f32 %v841, %v843
  %v847 = vsel %vm85, %v845, 0.0
  %848 = vadd.xlane.f32.xlu0 %v847
  %v849 = vpop.xlane.xlu0 %848
  %vm850 = vcmask 253952
  %v851 = vsel %vm850, %v846, 0.0
  %852 = vadd.xlane.f32.xlu0 %v851
  %v853 = vpop.xlane.xlu0 %852
  %v854 = vmul.f32 %v845, %v845
  %v855 = vmul.f32 %v846, %v846
  %v856 = vsel %vm85, %v854, 0.0
  %857 = vadd.xlane.f32.xlu0 %v856
  %v858 = vpop.xlane.xlu0 %857
  %v859 = vsel %vm850, %v855, 0.0
  %860 = vadd.xlane.f32.xlu0 %v859
  %v861 = vpop.xlane.xlu0 %860
  %v862 = vmul.f32 %v849, 0.03125
  %v863 = vmul.f32 %v853, 0.03125
  %v864 = vmul.f32 %v858, 0.03125
  %v865 = vmul.f32 %v861, 0.03125
  %v866 = vmul.f32 %v862, %v862
  %v867 = vmul.f32 %v863, %v863
  %v868 = vsub.f32 %v864, %v866
  %v869 = vsub.f32 %v865, %v867
  %v870 = vsub.f32 %v845, %v862
  %v871 = vsub.f32 %v846, %v863
  %v872 = vadd.f32 %v868, 1e-05
  %v873 = vadd.f32 %v869, 1e-05
  %v874 = vrsqrt.pop %v872
  %v875 = vmul.f32 %v874, %v872
  %v876 = vmul.f32 %v875, %v874
  %v877 = vmul.f32 0.5, %v876
  %v878 = vsub.f32 1.5, %v877
  %v879 = vmul.f32 %v874, %v878
  %vm880 = vweird.f32 %v872
  %vm881 = vweird.f32 %v874
  %vm882 = vmor %vm880, %vm881
  %v883 = vsel %vm882, %v874, %v879
  %v884 = vrsqrt.pop %v873
  %v885 = vmul.f32 %v884, %v873
  %v886 = vmul.f32 %v885, %v884
  %v887 = vmul.f32 0.5, %v886
  %v888 = vsub.f32 1.5, %v887
  %v889 = vmul.f32 %v884, %v888
  %vm890 = vweird.f32 %v873
  %vm891 = vweird.f32 %v884
  %vm892 = vmor %vm890, %vm891
  %v893 = vsel %vm892, %v884, %v889
  %v894 = vmul.f32 %v870, %v883
  %v895 = vmul.f32 %v871, %v893
  %v897 = vperm.slane %v50, 0
  %v899 = vmul.f32 %v894, %v897
  %v900 = vmul.f32 %v895, %v897
  %v902 = vperm.slane %v51, 0
  %v904 = vadd.f32 %v899, %v902
  %v905 = vadd.f32 %v900, %v902
  %v907 = vperm.slane %v57, 0
  %v910 = vsel %vm85, %v904, 0
  %v913 = vsel %vm85, %v905, 0
  %915 = vmatpush.msra.mxu0 0.0
  %916 = vmatpush.msra.mxu0 0.0
  %917 = vmatpush.msra.mxu0 0.0
  %918 = vmatpush.msra.mxu0 0.0
  %919 = vmatpush.msra.mxu0 0.0
  %920 = vmatpush.msra.mxu0 0.0
  %921 = vmatpush.msra.mxu0 0.0
  %922 = vmatpush.msra.mxu0 0.0
  %923 = vmatpush.msra.mxu0 0.0
  %924 = vmatpush.msra.mxu0 0.0
  %925 = vmatpush.msra.mxu0 0.0
  %926 = vmatpush.msra.mxu0 0.0
  %927 = vmatpush.msra.mxu0 %v56
  %928 = vmatpush.msra.mxu0 %v55
  %929 = vmatpush.msra.mxu0 %v54
  %930 = vmatpush.msra.mxu0 %v53
  %931 = vmatmul.f32.gmra.mxu0 %v910
  %v932 = vpop.f32.mrf.mxu0
  %v933 = vadd.f32 %v907, %v932
  %934 = vmatmul.f32.gmra.mxu0 %v913
  %v935 = vpop.f32.mrf.mxu0
  %v936 = vadd.f32 %v907, %v935
  %937 = vdwg.mxu0
  %v938 = vmul.f32 %v933, 1.702
  %v939 = vmul.f32 %v936, 1.702
  %v940 = vxor.u32 %v938, 2147483648
  %v941 = vxor.u32 %v939, 2147483648
  %v942 = vmul.f32 %v940, 1.442695
  %v943 = vpow.pop %v942
  %v944 = vmul.f32 %v941, 1.442695
  %v945 = vpow.pop %v944
  %v946 = vadd.f32 %v943, 1.0
  %v947 = vadd.f32 %v945, 1.0
  %v948 = vrcp.pop %v946
  %v949 = vmul.f32 %v946, %v948
  %v950 = vsub.f32 1.0, %v949
  %v951 = vmul.f32 %v948, %v950
  %v952 = vadd.f32 %v948, %v951
  %vm953 = vweird.f32 %v946
  %vm954 = vweird.f32 %v948
  %vm955 = vmor %vm953, %vm954
  %v956 = vsel %vm955, %v948, %v952
  %v957 = vand.u32 2147483647, %v946
  %vm958 = vcmp.eq.f32.partialorder %v957, 8.507059e+37
  %v959 = vand.u32 %v946, 2147483648
  %v960 = vor.u32 1.1754944e-38, %v959
  %v961 = vsel %vm958, %v960, %v956
  %v962 = vmul.f32 1.0, %v961
  %v963 = vrcp.pop %v947
  %v964 = vmul.f32 %v947, %v963
  %v965 = vsub.f32 1.0, %v964
  %v966 = vmul.f32 %v963, %v965
  %v967 = vadd.f32 %v963, %v966
  %vm968 = vweird.f32 %v947
  %vm969 = vweird.f32 %v963
  %vm970 = vmor %vm968, %vm969
  %v971 = vsel %vm970, %v963, %v967
  %v972 = vand.u32 2147483647, %v947
  %vm973 = vcmp.eq.f32.partialorder %v972, 8.507059e+37
  %v974 = vand.u32 %v947, 2147483648
  %v975 = vor.u32 1.1754944e-38, %v974
  %v976 = vsel %vm973, %v975, %v971
  %v977 = vmul.f32 1.0, %v976
  %v978 = vmul.f32 %v933, %v962
  %v979 = vmul.f32 %v936, %v977
  %v981 = vperm.slane %v74, 0
  %983 = vmatpush.msra.mxu0 %v73
  %984 = vmatpush.msra.mxu0 %v72
  %985 = vmatpush.msra.mxu0 %v71
  %986 = vmatpush.msra.mxu0 %v70
  %987 = vmatpush.msra.mxu0 %v69
  %988 = vmatpush.msra.mxu0 %v68
  %989 = vmatpush.msra.mxu0 %v67
  %990 = vmatpush.msra.mxu0 %v66
  %991 = vmatpush.msra.mxu0 %v65
  %992 = vmatpush.msra.mxu0 %v64
  %993 = vmatpush.msra.mxu0 %v63
  %994 = vmatpush.msra.mxu0 %v62
  %995 = vmatpush.msra.mxu0 %v61
  %996 = vmatpush.msra.mxu0 %v60
  %997 = vmatpush.msra.mxu0 %v59
  %998 = vmatpush.msra.mxu0 %v58
  %999 = vmatmul.f32.gmra.mxu0 %v978
  %v1000 = vpop.f32.mrf.mxu0
  %v1001 = vadd.f32 %v981, %v1000
  %1002 = vmatmul.f32.gmra.mxu0 %v979
  %v1003 = vpop.f32.mrf.mxu0
  %v1004 = vadd.f32 %v981, %v1003
  %1005 = vdwg.mxu0
  %v1006 = vadd.f32 %v845, %v1001
  %v1007 = vadd.f32 %v846, %v1004
  %vm1009 = vcmask 1046528
  %v1010 = vrot.slane %v205, 1
  %v1011 = vrot.slane %v208, 1
  %v1012 = vsel %vm1009, %v1010, %v1011
  %1013 = vrot.lane.b32.xlu0 %v1012, 96
  %v1014 = vpop.permute.xlu0 %1013
  %1015 = vrot.lane.b32.xlu0 %v1011, 96
  %v1016 = vpop.permute.xlu0 %1015
  %v1017 = vsel %vm216, %v1012, 0
  %v1019 = vsel %vm216, %v1011, 0
  %v1021 = vsel %vm216, %v1014, 0
  %v1023 = vsel %vm216, %v1016, 0
  %1025 = vmatpush.xpose.msra.mxu0 0.0
  %1026 = vmatpush.xpose.msra.mxu0 0.0
  %1027 = vmatpush.xpose.msra.mxu0 0.0
  %1028 = vmatpush.xpose.msra.mxu0 0.0
  %1029 = vmatpush.xpose.msra.mxu0 0.0
  %1030 = vmatpush.xpose.msra.mxu0 0.0
  %1031 = vmatpush.xpose.msra.mxu0 0.0
  %1032 = vmatpush.xpose.msra.mxu0 0.0
  %1033 = vmatpush.xpose.msra.mxu0 0.0
  %1034 = vmatpush.xpose.msra.mxu0 0.0
  %1035 = vmatpush.xpose.msra.mxu0 0.0
  %1036 = vmatpush.xpose.msra.mxu0 0.0
  %1037 = vmatpush.xpose.msra.mxu0 0.0
  %1038 = vmatpush.xpose.msra.mxu0 0.0
  %1039 = vmatpush.xpose.msra.mxu0 %v1023
  %1040 = vmatpush.xpose.msra.mxu0 %v1021
  %1041 = vmatmul.f32.gmra.mxu0 %v1017
  %v1042 = vpop.f32.mrf.mxu0
  %v1043 = vadd.f32 0.0, %v1042
  %1044 = vmatmul.f32.gmra.mxu0 %v1019
  %v1045 = vpop.f32.mrf.mxu0
  %v1046 = vadd.f32 0.0, %v1045
  %1047 = vdwg.mxu0
  %v1048 = vmul.f32 %v1043, 0.35355338
  %v1049 = vmul.f32 %v1046, 0.35355338
  %v1050 = vadd.f32 %v1048, %v46
  %v1051 = vadd.f32 %v1049, %v47
  %v1052 = vsel %vm252, %v1050, -inf
  %1053 = vmax.xlane.f32.xlu0 %v1052
  %v1054 = vpop.xlane.xlu0 %1053
  %v1055 = vsel %vm256, %v1051, -inf
  %1056 = vmax.xlane.f32.xlu0 %v1055
  %v1057 = vpop.xlane.xlu0 %1056
  %v1058 = vsub.f32 %v1050, %v1054
  %v1059 = vsub.f32 %v1051, %v1057
  %v1060 = vmul.f32 %v1058, 1.442695
  %v1061 = vpow.pop %v1060
  %v1062 = vmul.f32 %v1059, 1.442695
  %v1063 = vpow.pop %v1062
  %v1064 = vsel %vm252, %v1061, 0.0
  %1065 = vadd.xlane.f32.xlu0 %v1064
  %v1066 = vpop.xlane.xlu0 %1065
  %v1067 = vsel %vm256, %v1063, 0.0
  %1068 = vadd.xlane.f32.xlu0 %v1067
  %v1069 = vpop.xlane.xlu0 %1068
  %v1070 = vrcp.pop %v1066
  %v1071 = vmul.f32 %v1066, %v1070
  %v1072 = vsub.f32 1.0, %v1071
  %v1073 = vmul.f32 %v1070, %v1072
  %v1074 = vadd.f32 %v1070, %v1073
  %vm1075 = vweird.f32 %v1066
  %vm1076 = vweird.f32 %v1070
  %vm1077 = vmor %vm1075, %vm1076
  %v1078 = vsel %vm1077, %v1070, %v1074
  %v1079 = vand.u32 2147483647, %v1066
  %vm1080 = vcmp.eq.f32.partialorder %v1079, 8.507059e+37
  %v1081 = vand.u32 %v1066, 2147483648
  %v1082 = vor.u32 1.1754944e-38, %v1081
  %v1083 = vsel %vm1080, %v1082, %v1078
  %v1084 = vrcp.pop %v1069
  %v1085 = vmul.f32 %v1069, %v1084
  %v1086 = vsub.f32 1.0, %v1085
  %v1087 = vmul.f32 %v1084, %v1086
  %v1088 = vadd.f32 %v1084, %v1087
  %vm1089 = vweird.f32 %v1069
  %vm1090 = vweird.f32 %v1084
  %vm1091 = vmor %vm1089, %vm1090
  %v1092 = vsel %vm1091, %v1084, %v1088
  %v1093 = vand.u32 2147483647, %v1069
  %vm1094 = vcmp.eq.f32.partialorder %v1093, 8.507059e+37
  %v1095 = vand.u32 %v1069, 2147483648
  %v1096 = vor.u32 1.1754944e-38, %v1095
  %v1097 = vsel %vm1094, %v1096, %v1092
  %v1098 = vmul.f32 %v1061, %v1083
  %v1099 = vmul.f32 %v1063, %v1097
  %1100 = vrot.lane.b32.xlu0 %v1012, 64
  %v1101 = vpop.permute.xlu0 %1100
  %1102 = vrot.lane.b32.xlu0 %v1011, 64
  %v1103 = vpop.permute.xlu0 %1102
  %v1106 = vsel %vm252, %v1098, 0
  %v1109 = vsel %vm252, %v1099, 0
  %v1111 = vsel %vm313, %v1103, 0
  %1113 = vmatpush.msra.mxu0 0.0
  %1114 = vmatpush.msra.mxu0 0.0
  %1115 = vmatpush.msra.mxu0 0.0
  %1116 = vmatpush.msra.mxu0 0.0
  %1117 = vmatpush.msra.mxu0 0.0
  %1118 = vmatpush.msra.mxu0 0.0
  %1119 = vmatpush.msra.mxu0 0.0
  %1120 = vmatpush.msra.mxu0 0.0
  %1121 = vmatpush.msra.mxu0 0.0
  %1122 = vmatpush.msra.mxu0 0.0
  %1123 = vmatpush.msra.mxu0 0.0
  %1124 = vmatpush.msra.mxu0 0.0
  %1125 = vmatpush.msra.mxu0 0.0
  %1126 = vmatpush.msra.mxu0 0.0
  %1127 = vmatpush.msra.mxu0 %v1111
  %1128 = vmatpush.msra.mxu0 %v1101
  %1129 = vmatmul.f32.gmra.mxu0 %v1106
  %v1130 = vpop.f32.mrf.mxu0
  %v1131 = vadd.f32 0.0, %v1130
  %1132 = vmatmul.f32.gmra.mxu0 %v1109
  %v1133 = vpop.f32.mrf.mxu0
  %v1134 = vadd.f32 0.0, %v1133
  %1135 = vdwg.mxu0
  %1136 = vrot.lane.b32.xlu0 %v1012, 120
  %v1137 = vpop.permute.xlu0 %1136
  %1138 = vrot.lane.b32.xlu0 %v1011, 120
  %v1139 = vpop.permute.xlu0 %1138
  %1140 = vrot.lane.b32.xlu0 %v1012, 88
  %v1141 = vpop.permute.xlu0 %1140
  %1142 = vrot.lane.b32.xlu0 %v1011, 88
  %v1143 = vpop.permute.xlu0 %1142
  %v1144 = vsel %vm216, %v1137, 0
  %v1146 = vsel %vm216, %v1139, 0
  %v1148 = vsel %vm216, %v1141, 0
  %v1150 = vsel %vm216, %v1143, 0
  %1152 = vmatpush.xpose.msra.mxu0 0.0
  %1153 = vmatpush.xpose.msra.mxu0 0.0
  %1154 = vmatpush.xpose.msra.mxu0 0.0
  %1155 = vmatpush.xpose.msra.mxu0 0.0
  %1156 = vmatpush.xpose.msra.mxu0 0.0
  %1157 = vmatpush.xpose.msra.mxu0 0.0
  %1158 = vmatpush.xpose.msra.mxu0 0.0
  %1159 = vmatpush.xpose.msra.mxu0 0.0
  %1160 = vmatpush.xpose.msra.mxu0 0.0
  %1161 = vmatpush.xpose.msra.mxu0 0.0
  %1162 = vmatpush.xpose.msra.mxu0 0.0
  %1163 = vmatpush.xpose.msra.mxu0 0.0
  %1164 = vmatpush.xpose.msra.mxu0 0.0
  %1165 = vmatpush.xpose.msra.mxu0 0.0
  %1166 = vmatpush.xpose.msra.mxu0 %v1150
  %1167 = vmatpush.xpose.msra.mxu0 %v1148
  %1168 = vmatmul.f32.gmra.mxu0 %v1144
  %v1169 = vpop.f32.mrf.mxu0
  %v1170 = vadd.f32 0.0, %v1169
  %1171 = vmatmul.f32.gmra.mxu0 %v1146
  %v1172 = vpop.f32.mrf.mxu0
  %v1173 = vadd.f32 0.0, %v1172
  %1174 = vdwg.mxu0
  %v1175 = vmul.f32 %v1170, 0.35355338
  %v1176 = vmul.f32 %v1173, 0.35355338
  %v1177 = vadd.f32 %v1175, %v46
  %v1178 = vadd.f32 %v1176, %v47
  %v1179 = vsel %vm252, %v1177, -inf
  %1180 = vmax.xlane.f32.xlu0 %v1179
  %v1181 = vpop.xlane.xlu0 %1180
  %v1182 = vsel %vm256, %v1178, -inf
  %1183 = vmax.xlane.f32.xlu0 %v1182
  %v1184 = vpop.xlane.xlu0 %1183
  %v1185 = vsub.f32 %v1177, %v1181
  %v1186 = vsub.f32 %v1178, %v1184
  %v1187 = vmul.f32 %v1185, 1.442695
  %v1188 = vpow.pop %v1187
  %v1189 = vmul.f32 %v1186, 1.442695
  %v1190 = vpow.pop %v1189
  %v1191 = vsel %vm252, %v1188, 0.0
  %1192 = vadd.xlane.f32.xlu0 %v1191
  %v1193 = vpop.xlane.xlu0 %1192
  %v1194 = vsel %vm256, %v1190, 0.0
  %1195 = vadd.xlane.f32.xlu0 %v1194
  %v1196 = vpop.xlane.xlu0 %1195
  %v1197 = vrcp.pop %v1193
  %v1198 = vmul.f32 %v1193, %v1197
  %v1199 = vsub.f32 1.0, %v1198
  %v1200 = vmul.f32 %v1197, %v1199
  %v1201 = vadd.f32 %v1197, %v1200
  %vm1202 = vweird.f32 %v1193
  %vm1203 = vweird.f32 %v1197
  %vm1204 = vmor %vm1202, %vm1203
  %v1205 = vsel %vm1204, %v1197, %v1201
  %v1206 = vand.u32 2147483647, %v1193
  %vm1207 = vcmp.eq.f32.partialorder %v1206, 8.507059e+37
  %v1208 = vand.u32 %v1193, 2147483648
  %v1209 = vor.u32 1.1754944e-38, %v1208
  %v1210 = vsel %vm1207, %v1209, %v1205
  %v1211 = vrcp.pop %v1196
  %v1212 = vmul.f32 %v1196, %v1211
  %v1213 = vsub.f32 1.0, %v1212
  %v1214 = vmul.f32 %v1211, %v1213
  %v1215 = vadd.f32 %v1211, %v1214
  %vm1216 = vweird.f32 %v1196
  %vm1217 = vweird.f32 %v1211
  %vm1218 = vmor %vm1216, %vm1217
  %v1219 = vsel %vm1218, %v1211, %v1215
  %v1220 = vand.u32 2147483647, %v1196
  %vm1221 = vcmp.eq.f32.partialorder %v1220, 8.507059e+37
  %v1222 = vand.u32 %v1196, 2147483648
  %v1223 = vor.u32 1.1754944e-38, %v1222
  %v1224 = vsel %vm1221, %v1223, %v1219
  %v1225 = vmul.f32 %v1188, %v1210
  %v1226 = vmul.f32 %v1190, %v1224
  %1227 = vrot.lane.b32.xlu0 %v1012, 56
  %v1228 = vpop.permute.xlu0 %1227
  %1229 = vrot.lane.b32.xlu0 %v1011, 56
  %v1230 = vpop.permute.xlu0 %1229
  %v1233 = vsel %vm252, %v1225, 0
  %v1236 = vsel %vm252, %v1226, 0
  %v1238 = vsel %vm313, %v1230, 0
  %1240 = vmatpush.msra.mxu0 0.0
  %1241 = vmatpush.msra.mxu0 0.0
  %1242 = vmatpush.msra.mxu0 0.0
  %1243 = vmatpush.msra.mxu0 0.0
  %1244 = vmatpush.msra.mxu0 0.0
  %1245 = vmatpush.msra.mxu0 0.0
  %1246 = vmatpush.msra.mxu0 0.0
  %1247 = vmatpush.msra.mxu0 0.0
  %1248 = vmatpush.msra.mxu0 0.0
  %1249 = vmatpush.msra.mxu0 0.0
  %1250 = vmatpush.msra.mxu0 0.0
  %1251 = vmatpush.msra.mxu0 0.0
  %1252 = vmatpush.msra.mxu0 0.0
  %1253 = vmatpush.msra.mxu0 0.0
  %1254 = vmatpush.msra.mxu0 %v1238
  %1255 = vmatpush.msra.mxu0 %v1228
  %1256 = vmatmul.f32.gmra.mxu0 %v1233
  %v1257 = vpop.f32.mrf.mxu0
  %v1258 = vadd.f32 0.0, %v1257
  %1259 = vmatmul.f32.gmra.mxu0 %v1236
  %v1260 = vpop.f32.mrf.mxu0
  %v1261 = vadd.f32 0.0, %v1260
  %1262 = vdwg.mxu0
  %v1264 = vsel %vm216, %v1258, 0
  %v1267 = vsel %vm216, %v1261, 0
  %1269 = vmatpush.msra.mxu0 0.0
  %1270 = vmatpush.msra.mxu0 0.0
  %1271 = vmatpush.msra.mxu0 0.0
  %1272 = vmatpush.msra.mxu0 0.0
  %1273 = vmatpush.msra.mxu0 0.0
  %1274 = vmatpush.msra.mxu0 0.0
  %1275 = vmatpush.msra.mxu0 0.0
  %1276 = vmatpush.msra.mxu0 0.0
  %1277 = vmatpush.msra.mxu0 0.0
  %1278 = vmatpush.msra.mxu0 0.0
  %1279 = vmatpush.msra.mxu0 0.0
  %1280 = vmatpush.msra.mxu0 0.0
  %1281 = vmatpush.msra.mxu0 0.0
  %1282 = vmatpush.msra.mxu0 0.0
  %1283 = vmatpush.msra.mxu0 0.0
  %1284 = vmatpush.msra.mxu0 %v77
  %1285 = vmatmul.f32.gmra.mxu0 %v1264
  %v1286 = vpop.f32.mrf.mxu0
  %v1287 = vadd.f32 0.0, %v1286
  %1288 = vmatmul.f32.gmra.mxu0 %v1267
  %v1289 = vpop.f32.mrf.mxu0
  %v1290 = vadd.f32 0.0, %v1289
  %1291 = vdwg.mxu0
  %v1293 = vsel %vm216, %v1131, 0
  %v1296 = vsel %vm216, %v1134, 0
  %1298 = vmatpush.msra.mxu0 0.0
  %1299 = vmatpush.msra.mxu0 0.0
  %1300 = vmatpush.msra.mxu0 0.0
  %1301 = vmatpush.msra.mxu0 0.0
  %1302 = vmatpush.msra.mxu0 0.0
  %1303 = vmatpush.msra.mxu0 0.0
  %1304 = vmatpush.msra.mxu0 0.0
  %1305 = vmatpush.msra.mxu0 0.0
  %1306 = vmatpush.msra.mxu0 0.0
  %1307 = vmatpush.msra.mxu0 0.0
  %1308 = vmatpush.msra.mxu0 0.0
  %1309 = vmatpush.msra.mxu0 0.0
  %1310 = vmatpush.msra.mxu0 0.0
  %1311 = vmatpush.msra.mxu0 0.0
  %1312 = vmatpush.msra.mxu0 0.0
  %1313 = vmatpush.msra.mxu0 %v75
  %1314 = vmatmul.f32.gmra.mxu0 %v1293
  %v1315 = vpop.f32.mrf.mxu0
  %v1316 = vadd.f32 %v1287, %v1315
  %1317 = vmatmul.f32.gmra.mxu0 %v1296
  %v1318 = vpop.f32.mrf.mxu0
  %v1319 = vadd.f32 %v1290, %v1318
  %1320 = vdwg.mxu0
  %1321 = vrot.lane.b32.xlu0 %v1012, 112
  %v1322 = vpop.permute.xlu0 %1321
  %1323 = vrot.lane.b32.xlu0 %v1011, 112
  %v1324 = vpop.permute.xlu0 %1323
  %1325 = vrot.lane.b32.xlu0 %v1012, 80
  %v1326 = vpop.permute.xlu0 %1325
  %1327 = vrot.lane.b32.xlu0 %v1011, 80
  %v1328 = vpop.permute.xlu0 %1327
  %v1329 = vsel %vm216, %v1322, 0
  %v1331 = vsel %vm216, %v1324, 0
  %v1333 = vsel %vm216, %v1326, 0
  %v1335 = vsel %vm216, %v1328, 0
  %1337 = vmatpush.xpose.msra.mxu0 0.0
  %1338 = vmatpush.xpose.msra.mxu0 0.0
  %1339 = vmatpush.xpose.msra.mxu0 0.0
  %1340 = vmatpush.xpose.msra.mxu0 0.0
  %1341 = vmatpush.xpose.msra.mxu0 0.0
  %1342 = vmatpush.xpose.msra.mxu0 0.0
  %1343 = vmatpush.xpose.msra.mxu0 0.0
  %1344 = vmatpush.xpose.msra.mxu0 0.0
  %1345 = vmatpush.xpose.msra.mxu0 0.0
  %1346 = vmatpush.xpose.msra.mxu0 0.0
  %1347 = vmatpush.xpose.msra.mxu0 0.0
  %1348 = vmatpush.xpose.msra.mxu0 0.0
  %1349 = vmatpush.xpose.msra.mxu0 0.0
  %1350 = vmatpush.xpose.msra.mxu0 0.0
  %1351 = vmatpush.xpose.msra.mxu0 %v1335
  %1352 = vmatpush.xpose.msra.mxu0 %v1333
  %1353 = vmatmul.f32.gmra.mxu0 %v1329
  %v1354 = vpop.f32.mrf.mxu0
  %v1355 = vadd.f32 0.0, %v1354
  %1356 = vmatmul.f32.gmra.mxu0 %v1331
  %v1357 = vpop.f32.mrf.mxu0
  %v1358 = vadd.f32 0.0, %v1357
  %1359 = vdwg.mxu0
  %v1360 = vmul.f32 %v1355, 0.35355338
  %v1361 = vmul.f32 %v1358, 0.35355338
  %v1362 = vadd.f32 %v1360, %v46
  %v1363 = vadd.f32 %v1361, %v47
  %v1364 = vsel %vm252, %v1362, -inf
  %1365 = vmax.xlane.f32.xlu0 %v1364
  %v1366 = vpop.xlane.xlu0 %1365
  %v1367 = vsel %vm256, %v1363, -inf
  %1368 = vmax.xlane.f32.xlu0 %v1367
  %v1369 = vpop.xlane.xlu0 %1368
  %v1370 = vsub.f32 %v1362, %v1366
  %v1371 = vsub.f32 %v1363, %v1369
  %v1372 = vmul.f32 %v1370, 1.442695
  %v1373 = vpow.pop %v1372
  %v1374 = vmul.f32 %v1371, 1.442695
  %v1375 = vpow.pop %v1374
  %v1376 = vsel %vm252, %v1373, 0.0
  %1377 = vadd.xlane.f32.xlu0 %v1376
  %v1378 = vpop.xlane.xlu0 %1377
  %v1379 = vsel %vm256, %v1375, 0.0
  %1380 = vadd.xlane.f32.xlu0 %v1379
  %v1381 = vpop.xlane.xlu0 %1380
  %v1382 = vrcp.pop %v1378
  %v1383 = vmul.f32 %v1378, %v1382
  %v1384 = vsub.f32 1.0, %v1383
  %v1385 = vmul.f32 %v1382, %v1384
  %v1386 = vadd.f32 %v1382, %v1385
  %vm1387 = vweird.f32 %v1378
  %vm1388 = vweird.f32 %v1382
  %vm1389 = vmor %vm1387, %vm1388
  %v1390 = vsel %vm1389, %v1382, %v1386
  %v1391 = vand.u32 2147483647, %v1378
  %vm1392 = vcmp.eq.f32.partialorder %v1391, 8.507059e+37
  %v1393 = vand.u32 %v1378, 2147483648
  %v1394 = vor.u32 1.1754944e-38, %v1393
  %v1395 = vsel %vm1392, %v1394, %v1390
  %v1396 = vrcp.pop %v1381
  %v1397 = vmul.f32 %v1381, %v1396
  %v1398 = vsub.f32 1.0, %v1397
  %v1399 = vmul.f32 %v1396, %v1398
  %v1400 = vadd.f32 %v1396, %v1399
  %vm1401 = vweird.f32 %v1381
  %vm1402 = vweird.f32 %v1396
  %vm1403 = vmor %vm1401, %vm1402
  %v1404 = vsel %vm1403, %v1396, %v1400
  %v1405 = vand.u32 2147483647, %v1381
  %vm1406 = vcmp.eq.f32.partialorder %v1405, 8.507059e+37
  %v1407 = vand.u32 %v1381, 2147483648
  %v1408 = vor.u32 1.1754944e-38, %v1407
  %v1409 = vsel %vm1406, %v1408, %v1404
  %v1410 = vmul.f32 %v1373, %v1395
  %v1411 = vmul.f32 %v1375, %v1409
  %1412 = vrot.lane.b32.xlu0 %v1012, 48
  %v1413 = vpop.permute.xlu0 %1412
  %1414 = vrot.lane.b32.xlu0 %v1011, 48
  %v1415 = vpop.permute.xlu0 %1414
  %v1418 = vsel %vm252, %v1410, 0
  %v1421 = vsel %vm252, %v1411, 0
  %v1423 = vsel %vm313, %v1415, 0
  %1425 = vmatpush.msra.mxu0 0.0
  %1426 = vmatpush.msra.mxu0 0.0
  %1427 = vmatpush.msra.mxu0 0.0
  %1428 = vmatpush.msra.mxu0 0.0
  %1429 = vmatpush.msra.mxu0 0.0
  %1430 = vmatpush.msra.mxu0 0.0
  %1431 = vmatpush.msra.mxu0 0.0
  %1432 = vmatpush.msra.mxu0 0.0
  %1433 = vmatpush.msra.mxu0 0.0
  %1434 = vmatpush.msra.mxu0 0.0
  %1435 = vmatpush.msra.mxu0 0.0
  %1436 = vmatpush.msra.mxu0 0.0
  %1437 = vmatpush.msra.mxu0 0.0
  %1438 = vmatpush.msra.mxu0 0.0
  %1439 = vmatpush.msra.mxu0 %v1423
  %1440 = vmatpush.msra.mxu0 %v1413
  %1441 = vmatmul.f32.gmra.mxu0 %v1418
  %v1442 = vpop.f32.mrf.mxu0
  %v1443 = vadd.f32 0.0, %v1442
  %1444 = vmatmul.f32.gmra.mxu0 %v1421
  %v1445 = vpop.f32.mrf.mxu0
  %v1446 = vadd.f32 0.0, %v1445
  %1447 = vdwg.mxu0
  %v1449 = vsel %vm216, %v1443, 0
  %v1452 = vsel %vm216, %v1446, 0
  %1454 = vmatpush.msra.mxu0 0.0
  %1455 = vmatpush.msra.mxu0 0.0
  %1456 = vmatpush.msra.mxu0 0.0
  %1457 = vmatpush.msra.mxu0 0.0
  %1458 = vmatpush.msra.mxu0 0.0
  %1459 = vmatpush.msra.mxu0 0.0
  %1460 = vmatpush.msra.mxu0 0.0
  %1461 = vmatpush.msra.mxu0 0.0
  %1462 = vmatpush.msra.mxu0 0.0
  %1463 = vmatpush.msra.mxu0 0.0
  %1464 = vmatpush.msra.mxu0 0.0
  %1465 = vmatpush.msra.mxu0 0.0
  %1466 = vmatpush.msra.mxu0 0.0
  %1467 = vmatpush.msra.mxu0 0.0
  %1468 = vmatpush.msra.mxu0 0.0
  %1469 = vmatpush.msra.mxu0 %v79
  %1470 = vmatmul.f32.gmra.mxu0 %v1449
  %v1471 = vpop.f32.mrf.mxu0
  %v1472 = vadd.f32 0.0, %v1471
  %1473 = vmatmul.f32.gmra.mxu0 %v1452
  %v1474 = vpop.f32.mrf.mxu0
  %v1475 = vadd.f32 0.0, %v1474
  %1476 = vdwg.mxu0
  %v1477 = vadd.f32 %v1316, %v1472
  %v1478 = vadd.f32 %v1319, %v1475
  %1479 = vrot.lane.b32.xlu0 %v1012, 104
  %v1480 = vpop.permute.xlu0 %1479
  %1481 = vrot.lane.b32.xlu0 %v1011, 104
  %v1482 = vpop.permute.xlu0 %1481
  %1483 = vrot.lane.b32.xlu0 %v1012, 72
  %v1484 = vpop.permute.xlu0 %1483
  %1485 = vrot.lane.b32.xlu0 %v1011, 72
  %v1486 = vpop.permute.xlu0 %1485
  %v1487 = vsel %vm216, %v1480, 0
  %v1489 = vsel %vm216, %v1482, 0
  %v1491 = vsel %vm216, %v1484, 0
  %v1493 = vsel %vm216, %v1486, 0
  %1495 = vmatpush.xpose.msra.mxu0 0.0
  %1496 = vmatpush.xpose.msra.mxu0 0.0
  %1497 = vmatpush.xpose.msra.mxu0 0.0
  %1498 = vmatpush.xpose.msra.mxu0 0.0
  %1499 = vmatpush.xpose.msra.mxu0 0.0
  %1500 = vmatpush.xpose.msra.mxu0 0.0
  %1501 = vmatpush.xpose.msra.mxu0 0.0
  %1502 = vmatpush.xpose.msra.mxu0 0.0
  %1503 = vmatpush.xpose.msra.mxu0 0.0
  %1504 = vmatpush.xpose.msra.mxu0 0.0
  %1505 = vmatpush.xpose.msra.mxu0 0.0
  %1506 = vmatpush.xpose.msra.mxu0 0.0
  %1507 = vmatpush.xpose.msra.mxu0 0.0
  %1508 = vmatpush.xpose.msra.mxu0 0.0
  %1509 = vmatpush.xpose.msra.mxu0 %v1493
  %1510 = vmatpush.xpose.msra.mxu0 %v1491
  %1511 = vmatmul.f32.gmra.mxu0 %v1487
  %v1512 = vpop.f32.mrf.mxu0
  %v1513 = vadd.f32 0.0, %v1512
  %1514 = vmatmul.f32.gmra.mxu0 %v1489
  %v1515 = vpop.f32.mrf.mxu0
  %v1516 = vadd.f32 0.0, %v1515
  %1517 = vdwg.mxu0
  %v1518 = vmul.f32 %v1513, 0.35355338
  %v1519 = vmul.f32 %v1516, 0.35355338
  %v1520 = vadd.f32 %v1518, %v46
  %v1521 = vadd.f32 %v1519, %v47
  %v1522 = vsel %vm252, %v1520, -inf
  %1523 = vmax.xlane.f32.xlu0 %v1522
  %v1524 = vpop.xlane.xlu0 %1523
  %v1525 = vsel %vm256, %v1521, -inf
  %1526 = vmax.xlane.f32.xlu0 %v1525
  %v1527 = vpop.xlane.xlu0 %1526
  %v1528 = vsub.f32 %v1520, %v1524
  %v1529 = vsub.f32 %v1521, %v1527
  %v1530 = vmul.f32 %v1528, 1.442695
  %v1531 = vpow.pop %v1530
  %v1532 = vmul.f32 %v1529, 1.442695
  %v1533 = vpow.pop %v1532
  %v1534 = vsel %vm252, %v1531, 0.0
  %1535 = vadd.xlane.f32.xlu0 %v1534
  %v1536 = vpop.xlane.xlu0 %1535
  %v1537 = vsel %vm256, %v1533, 0.0
  %1538 = vadd.xlane.f32.xlu0 %v1537
  %v1539 = vpop.xlane.xlu0 %1538
  %v1540 = vrcp.pop %v1536
  %v1541 = vmul.f32 %v1536, %v1540
  %v1542 = vsub.f32 1.0, %v1541
  %v1543 = vmul.f32 %v1540, %v1542
  %v1544 = vadd.f32 %v1540, %v1543
  %vm1545 = vweird.f32 %v1536
  %vm1546 = vweird.f32 %v1540
  %vm1547 = vmor %vm1545, %vm1546
  %v1548 = vsel %vm1547, %v1540, %v1544
  %v1549 = vand.u32 2147483647, %v1536
  %vm1550 = vcmp.eq.f32.partialorder %v1549, 8.507059e+37
  %v1551 = vand.u32 %v1536, 2147483648
  %v1552 = vor.u32 1.1754944e-38, %v1551
  %v1553 = vsel %vm1550, %v1552, %v1548
  %v1554 = vrcp.pop %v1539
  %v1555 = vmul.f32 %v1539, %v1554
  %v1556 = vsub.f32 1.0, %v1555
  %v1557 = vmul.f32 %v1554, %v1556
  %v1558 = vadd.f32 %v1554, %v1557
  %vm1559 = vweird.f32 %v1539
  %vm1560 = vweird.f32 %v1554
  %vm1561 = vmor %vm1559, %vm1560
  %v1562 = vsel %vm1561, %v1554, %v1558
  %v1563 = vand.u32 2147483647, %v1539
  %vm1564 = vcmp.eq.f32.partialorder %v1563, 8.507059e+37
  %v1565 = vand.u32 %v1539, 2147483648
  %v1566 = vor.u32 1.1754944e-38, %v1565
  %v1567 = vsel %vm1564, %v1566, %v1562
  %v1568 = vmul.f32 %v1531, %v1553
  %v1569 = vmul.f32 %v1533, %v1567
  %1570 = vrot.lane.b32.xlu0 %v1012, 40
  %v1571 = vpop.permute.xlu0 %1570
  %1572 = vrot.lane.b32.xlu0 %v1011, 40
  %v1573 = vpop.permute.xlu0 %1572
  %v1576 = vsel %vm252, %v1568, 0
  %v1579 = vsel %vm252, %v1569, 0
  %v1581 = vsel %vm313, %v1573, 0
  %1583 = vmatpush.msra.mxu0 0.0
  %1584 = vmatpush.msra.mxu0 0.0
  %1585 = vmatpush.msra.mxu0 0.0
  %1586 = vmatpush.msra.mxu0 0.0
  %1587 = vmatpush.msra.mxu0 0.0
  %1588 = vmatpush.msra.mxu0 0.0
  %1589 = vmatpush.msra.mxu0 0.0
  %1590 = vmatpush.msra.mxu0 0.0
  %1591 = vmatpush.msra.mxu0 0.0
  %1592 = vmatpush.msra.mxu0 0.0
  %1593 = vmatpush.msra.mxu0 0.0
  %1594 = vmatpush.msra.mxu0 0.0
  %1595 = vmatpush.msra.mxu0 0.0
  %1596 = vmatpush.msra.mxu0 0.0
  %1597 = vmatpush.msra.mxu0 %v1581
  %1598 = vmatpush.msra.mxu0 %v1571
  %1599 = vmatmul.f32.gmra.mxu0 %v1576
  %v1600 = vpop.f32.mrf.mxu0
  %v1601 = vadd.f32 0.0, %v1600
  %1602 = vmatmul.f32.gmra.mxu0 %v1579
  %v1603 = vpop.f32.mrf.mxu0
  %v1604 = vadd.f32 0.0, %v1603
  %1605 = vdwg.mxu0
  %v1607 = vsel %vm216, %v1601, 0
  %v1610 = vsel %vm216, %v1604, 0
  %1612 = vmatpush.msra.mxu0 0.0
  %1613 = vmatpush.msra.mxu0 0.0
  %1614 = vmatpush.msra.mxu0 0.0
  %1615 = vmatpush.msra.mxu0 0.0
  %1616 = vmatpush.msra.mxu0 0.0
  %1617 = vmatpush.msra.mxu0 0.0
  %1618 = vmatpush.msra.mxu0 0.0
  %1619 = vmatpush.msra.mxu0 0.0
  %1620 = vmatpush.msra.mxu0 0.0
  %1621 = vmatpush.msra.mxu0 0.0
  %1622 = vmatpush.msra.mxu0 0.0
  %1623 = vmatpush.msra.mxu0 0.0
  %1624 = vmatpush.msra.mxu0 0.0
  %1625 = vmatpush.msra.mxu0 0.0
  %1626 = vmatpush.msra.mxu0 0.0
  %1627 = vmatpush.msra.mxu0 %v81
  %1628 = vmatmul.f32.gmra.mxu0 %v1607
  %v1629 = vpop.f32.mrf.mxu0
  %v1630 = vadd.f32 0.0, %v1629
  %1631 = vmatmul.f32.gmra.mxu0 %v1610
  %v1632 = vpop.f32.mrf.mxu0
  %v1633 = vadd.f32 0.0, %v1632
  %1634 = vdwg.mxu0
  %v1635 = vadd.f32 %v1477, %v1630
  %v1636 = vadd.f32 %v1478, %v1633
  %v1639 = vrot.slane %v1635, 7
  %v1640 = vrot.slane %v1636, 7
  %v1641 = vsel %vm313, %v1639, %v1640
  %v1644 = vadd.f32 %v83, %v1639
  %v1645 = vadd.f32 %v84, %v1641
  %v1646 = vadd.f32 %v1644, %v843
  %v1647 = vadd.f32 %v1645, %v843
  %vm1648 = vcmask 261121
  %v1649 = vsel %vm1648, %v1646, 0.0
  %1650 = vadd.xlane.f32.xlu0 %v1649
  %v1651 = vpop.xlane.xlu0 %1650
  %v1652 = vsel %vm92, %v1647, 0.0
  %1653 = vadd.xlane.f32.xlu0 %v1652
  %v1654 = vpop.xlane.xlu0 %1653
  %v1655 = vmul.f32 %v1646, %v1646
  %v1656 = vmul.f32 %v1647, %v1647
  %v1657 = vsel %vm1648, %v1655, 0.0
  %1658 = vadd.xlane.f32.xlu0 %v1657
  %v1659 = vpop.xlane.xlu0 %1658
  %v1660 = vsel %vm92, %v1656, 0.0
  %1661 = vadd.xlane.f32.xlu0 %v1660
  %v1662 = vpop.xlane.xlu0 %1661
  %v1663 = vmul.f32 %v1651, 0.03125
  %v1664 = vmul.f32 %v1654, 0.03125
  %v1665 = vmul.f32 %v1659, 0.03125
  %v1666 = vmul.f32 %v1662, 0.03125
  %v1667 = vmul.f32 %v1663, %v1663
  %v1668 = vmul.f32 %v1664, %v1664
  %v1669 = vsub.f32 %v1665, %v1667
  %v1670 = vsub.f32 %v1666, %v1668
  %v1671 = vsub.f32 %v1646, %v1663
  %v1672 = vsub.f32 %v1647, %v1664
  %v1673 = vadd.f32 %v1669, 1e-05
  %v1674 = vadd.f32 %v1670, 1e-05
  %v1675 = vrsqrt.pop %v1673
  %v1676 = vmul.f32 %v1675, %v1673
  %v1677 = vmul.f32 %v1676, %v1675
  %v1678 = vmul.f32 0.5, %v1677
  %v1679 = vsub.f32 1.5, %v1678
  %v1680 = vmul.f32 %v1675, %v1679
  %vm1681 = vweird.f32 %v1673
  %vm1682 = vweird.f32 %v1675
  %vm1683 = vmor %vm1681, %vm1682
  %v1684 = vsel %vm1683, %v1675, %v1680
  %v1685 = vrsqrt.pop %v1674
  %v1686 = vmul.f32 %v1685, %v1674
  %v1687 = vmul.f32 %v1686, %v1685
  %v1688 = vmul.f32 0.5, %v1687
  %v1689 = vsub.f32 1.5, %v1688
  %v1690 = vmul.f32 %v1685, %v1689
  %vm1691 = vweird.f32 %v1674
  %vm1692 = vweird.f32 %v1685
  %vm1693 = vmor %vm1691, %vm1692
  %v1694 = vsel %vm1693, %v1685, %v1690
  %v1695 = vmul.f32 %v1671, %v1684
  %v1696 = vmul.f32 %v1672, %v1694
  %v1697 = vmul.f32 %v1695, %v897
  %v1698 = vmul.f32 %v1696, %v897
  %v1699 = vadd.f32 %v1697, %v902
  %v1700 = vadd.f32 %v1698, %v902
  %v1703 = vrot.slane %v1699, 1
  %v1704 = vrot.slane %v1700, 1
  %v1705 = vsel %vm1009, %v1703, %v1704
  %v1706 = vsel %vm85, %v1705, 0
  %v1708 = vsel %vm85, %v1704, 0
  %1710 = vmatpush.msra.mxu0 0.0
  %1711 = vmatpush.msra.mxu0 0.0
  %1712 = vmatpush.msra.mxu0 0.0
  %1713 = vmatpush.msra.mxu0 0.0
  %1714 = vmatpush.msra.mxu0 0.0
  %1715 = vmatpush.msra.mxu0 0.0
  %1716 = vmatpush.msra.mxu0 0.0
  %1717 = vmatpush.msra.mxu0 0.0
  %1718 = vmatpush.msra.mxu0 0.0
  %1719 = vmatpush.msra.mxu0 0.0
  %1720 = vmatpush.msra.mxu0 0.0
  %1721 = vmatpush.msra.mxu0 0.0
  %1722 = vmatpush.msra.mxu0 %v56
  %1723 = vmatpush.msra.mxu0 %v55
  %1724 = vmatpush.msra.mxu0 %v54
  %1725 = vmatpush.msra.mxu0 %v53
  %1726 = vmatmul.f32.gmra.mxu0 %v1706
  %v1727 = vpop.f32.mrf.mxu0
  %v1728 = vadd.f32 %v907, %v1727
  %1729 = vmatmul.f32.gmra.mxu0 %v1708
  %v1730 = vpop.f32.mrf.mxu0
  %v1731 = vadd.f32 %v907, %v1730
  %1732 = vdwg.mxu0
  %v1733 = vmul.f32 %v1728, 1.702
  %v1734 = vmul.f32 %v1731, 1.702
  %v1735 = vxor.u32 %v1733, 2147483648
  %v1736 = vxor.u32 %v1734, 2147483648
  %v1737 = vmul.f32 %v1735, 1.442695
  %v1738 = vpow.pop %v1737
  %v1739 = vmul.f32 %v1736, 1.442695
  %v1740 = vpow.pop %v1739
  %v1741 = vadd.f32 %v1738, 1.0
  %v1742 = vadd.f32 %v1740, 1.0
  %v1743 = vrcp.pop %v1741
  %v1744 = vmul.f32 %v1741, %v1743
  %v1745 = vsub.f32 1.0, %v1744
  %v1746 = vmul.f32 %v1743, %v1745
  %v1747 = vadd.f32 %v1743, %v1746
  %vm1748 = vweird.f32 %v1741
  %vm1749 = vweird.f32 %v1743
  %vm1750 = vmor %vm1748, %vm1749
  %v1751 = vsel %vm1750, %v1743, %v1747
  %v1752 = vand.u32 2147483647, %v1741
  %vm1753 = vcmp.eq.f32.partialorder %v1752, 8.507059e+37
  %v1754 = vand.u32 %v1741, 2147483648
  %v1755 = vor.u32 1.1754944e-38, %v1754
  %v1756 = vsel %vm1753, %v1755, %v1751
  %v1757 = vmul.f32 1.0, %v1756
  %v1758 = vrcp.pop %v1742
  %v1759 = vmul.f32 %v1742, %v1758
  %v1760 = vsub.f32 1.0, %v1759
  %v1761 = vmul.f32 %v1758, %v1760
  %v1762 = vadd.f32 %v1758, %v1761
  %vm1763 = vweird.f32 %v1742
  %vm1764 = vweird.f32 %v1758
  %vm1765 = vmor %vm1763, %vm1764
  %v1766 = vsel %vm1765, %v1758, %v1762
  %v1767 = vand.u32 2147483647, %v1742
  %vm1768 = vcmp.eq.f32.partialorder %v1767, 8.507059e+37
  %v1769 = vand.u32 %v1742, 2147483648
  %v1770 = vor.u32 1.1754944e-38, %v1769
  %v1771 = vsel %vm1768, %v1770, %v1766
  %v1772 = vmul.f32 1.0, %v1771
  %v1773 = vmul.f32 %v1728, %v1757
  %v1774 = vmul.f32 %v1731, %v1772
  %1775 = vmatpush.msra.mxu0 %v73
  %1776 = vmatpush.msra.mxu0 %v72
  %1777 = vmatpush.msra.mxu0 %v71
  %1778 = vmatpush.msra.mxu0 %v70
  %1779 = vmatpush.msra.mxu0 %v69
  %1780 = vmatpush.msra.mxu0 %v68
  %1781 = vmatpush.msra.mxu0 %v67
  %1782 = vmatpush.msra.mxu0 %v66
  %1783 = vmatpush.msra.mxu0 %v65
  %1784 = vmatpush.msra.mxu0 %v64
  %1785 = vmatpush.msra.mxu0 %v63
  %1786 = vmatpush.msra.mxu0 %v62
  %1787 = vmatpush.msra.mxu0 %v61
  %1788 = vmatpush.msra.mxu0 %v60
  %1789 = vmatpush.msra.mxu0 %v59
  %1790 = vmatpush.msra.mxu0 %v58
  %1791 = vmatmul.f32.gmra.mxu0 %v1773
  %v1792 = vpop.f32.mrf.mxu0
  %v1793 = vadd.f32 %v981, %v1792
  %1794 = vmatmul.f32.gmra.mxu0 %v1774
  %v1795 = vpop.f32.mrf.mxu0
  %v1796 = vadd.f32 %v981, %v1795
  %1797 = vdwg.mxu0
  %v1800 = vrot.slane %v1793, 7
  %v1801 = vrot.slane %v1796, 7
  %v1802 = vsel %vm313, %v1800, %v1801
  %v1805 = vadd.f32 %v1646, %v1800
  %v1806 = vadd.f32 %v1647, %v1802
  %1807 = vst.msk [vmem:[%s14] sm:$0xff] %vm252, %v300
  %1808 = vst.msk [vmem:[%s14 + $0x8] sm:$0x1] %vm256, %v301
  %1809 = vst.msk [vmem:[%s14 + $0x10] sm:$0xff] %vm252, %v428
  %1810 = vst.msk [vmem:[%s14 + $0x18] sm:$0x1] %vm256, %v429
  %1811 = vst.msk [vmem:[%s14 + $0x20] sm:$0xff] %vm252, %v613
  %1812 = vst.msk [vmem:[%s14 + $0x28] sm:$0x1] %vm256, %v614
  %1813 = vst.msk [vmem:[%s14 + $0x30] sm:$0xff] %vm252, %v771
  %1814 = vst.msk [vmem:[%s14 + $0x38] sm:$0x1] %vm256, %v772
  %1815 = vst.msk [vmem:[%s14 + $0x40] sm:$0xff] %vm252, %v1098
  %1816 = vst.msk [vmem:[%s14 + $0x48] sm:$0x1] %vm256, %v1099
  %1817 = vst.msk [vmem:[%s14 + $0x50] sm:$0xff] %vm252, %v1225
  %1818 = vst.msk [vmem:[%s14 + $0x58] sm:$0x1] %vm256, %v1226
  %1819 = vst.msk [vmem:[%s14 + $0x60] sm:$0xff] %vm252, %v1410
  %1820 = vst.msk [vmem:[%s14 + $0x68] sm:$0x1] %vm256, %v1411
  %1821 = vst.msk [vmem:[%s14 + $0x70] sm:$0xff] %vm252, %v1568
  %1822 = vst.msk [vmem:[%s14 + $0x78] sm:$0x1] %vm256, %v1569
  %v1825 = vrot.slane %v1805, 1
  %v1826 = vrot.slane %v1806, 1
  %v1827 = vsel %vm1009, %v1825, %v1826
  %1830 = vst.msk [vmem:[%s13] sm:$0xff] %vm85, %v1006
  %1831 = vst.msk [vmem:[%s13 + $0x8] sm:$0x1] %vm850, %v1007
  %1832 = vst.msk [vmem:[%s13 + $0x10] sm:$0xff] %vm85, %v1827
  %1833 = vst.msk [vmem:[%s13 + $0x18] sm:$0x1] %vm850, %v1826
  // Predicated region
  $region54: #{residual_attention_block.1} parent=0 // pred_check
    _
  $region55: #{residual_attention_block.1} parent=0 // pred_check_branch
    %1835 = sbr.rel (0) target = $region57
  $region56: #{residual_attention_block.1} parent=0 // pred_region
    _
  $region57: #{residual_attention_block.1} parent=0 // pred_fallthru
    _
  // Predicated region
  $region58: #{residual_attention_block.1} parent=0 // pred_check
    _
  $region59: #{residual_attention_block.1} parent=0 // pred_check_branch
    %1837 = sbr.rel (0) target = $region61
  $region60: #{residual_attention_block.1} parent=0 // pred_region
    _
  $region61: #{residual_attention_block.1} parent=0 // pred_fallthru
    _
  // Predicated region
  $region62: #{residual_attention_block.1} parent=0 // pred_check
    _
  $region63: #{residual_attention_block.1} parent=0 // pred_check_branch
    %1839 = sbr.rel (0) target = $region65
  $region64: #{residual_attention_block.1} parent=0 // pred_region
    _
  $region65: #{residual_attention_block.1} parent=0 // pred_fallthru
    _
  // Predicated region
  $region66: #{residual_attention_block.1} parent=0 // pred_check
    _
  $region67: #{residual_attention_block.1} parent=0 // pred_check_branch
    %1841 = sbr.rel (0) target = $region69
  $region68: #{residual_attention_block.1} parent=0 // pred_region
    _
  $region69: #{residual_attention_block.1} parent=0 // pred_fallthru
    _

</llo_original>
